<compile_context>
chip_gen: v7x
topology: tpu7x:2x2x1
jax: 0.10.0
libtpu: 0.0.40
codegen_flags: <defaults>
</compile_context>

<pallas_src>
import functools

import jax
import jax.numpy as jnp
from jax.experimental import pallas as pl
from jax.experimental.pallas import tpu as pltpu


# ----------------------------- fused Pallas kernel -----------------------------

def fused_kernel(in_channel, sr, hid, classes, out_w, *refs):
    """All modalities + final MM classifier in one kernel invocation.

    Per modality the refs are (x, w_info, w_enc, b_pre, w_head, b_head):
      x      : (ch, tile_b, sr)   channel-major, so each channel's rows are contiguous
      w_info : (sr, sr)           FeatureInforEncoder weight
      w_enc  : (sr, hid)          FeatureEncoder weight
      b_pre  : (1, sr + hid)      [b_info | b_enc]
      w_head : (ch, hid, 2C+1)    [w_cls | w_conf | w_mm_slice] reshaped per channel
      b_head : (1, 2C+1)          [b_cls | b_conf | 0]
    followed by the shared b_mm (1, C) and the packed output ref (tile_b, out_w).

    Packed output columns: [MMlogit (C)] + per modality [TCP logit (C), TCP conf (1)].
    """
    n_mod = len(in_channel)
    per = 6
    nh = 2 * classes + 1
    b_mm_ref = refs[per * n_mod]
    out_ref = refs[per * n_mod + 1]
    tb = out_ref.shape[0]

    # One full-width (lane-dense) zero store; the low lanes are overwritten below.
    out_ref[...] = jnp.zeros((tb, out_w), dtype=jnp.float32)

    mm_acc = jnp.broadcast_to(b_mm_ref[...], (tb, classes))         # init with b_mm
    col = classes
    for m, ch in enumerate(in_channel):
        x_ref, wi_ref, we_ref, bp_ref, wh_ref, bh_ref = refs[m * per:(m + 1) * per]
        w_info = wi_ref[...]
        w_enc = we_ref[...]
        b_pre = bp_ref[...]
        b_info = b_pre[:, :sr]
        b_enc = b_pre[:, sr:]

        # Fused TCP-classifier / TCP-confidence / MM-classifier head, accumulated
        # channel by channel -> no (bs*ch, hid) -> (bs, ch*hid) relayout in-kernel.
        head = jnp.broadcast_to(bh_ref[...], (tb, nh))               # bias init
        for c in range(ch):                                          # ch is small & static
            xc = x_ref[c]                                            # (tb, sr)
            info = jax.nn.sigmoid(
                jnp.dot(xc, w_info, preferred_element_type=jnp.float32) + b_info)
            hc = jnp.maximum(
                jnp.dot(xc * info, w_enc, preferred_element_type=jnp.float32) + b_enc,
                0.0)                                                 # ReLU; dropout=identity (eval)
            head = head + jnp.dot(hc, wh_ref[c],
                                  preferred_element_type=jnp.float32)

        logit_m = head[:, :classes]                                  # TCP logits
        conf_m = head[:, classes:classes + 1]                        # TCP confidence
        mm_part = head[:, classes + 1:]                              # feat2d @ w_mm_slice
        mm_acc = mm_acc + conf_m * mm_part                           # == (feat2d*conf) @ w_mm_slice

        out_ref[:, col:col + classes] = logit_m
        col += classes
        out_ref[:, col:col + 1] = conf_m
        col += 1

    out_ref[:, 0:classes] = mm_acc                                   # final MMlogit


# ----------------------------- host-side prep / wrapper -----------------------------

def _pick_tile_b(bs):
    """Batch tile: full batch if small, else the biggest multiple-of-8 divisor
    up to 512 (big tiles amortize per-grid-step overhead; (8,128) rule holds)."""
    if bs <= 512:
        return bs
    for t in (512, 256, 128, 64, 32, 16, 8):
        if bs % t == 0:
            return t
    return bs


def prepare_fused_inputs(data_list, params, *, in_channel, sr, hid, classes):
    """One-time host-side weight reshaping/packing (outside the hot kernel)."""
    arrays = []
    offset = 0
    for m, ch in enumerate(in_channel):
        p = params["modalities"][m]
        # channel-major input so per-channel rows are a contiguous leading-axis slice
        x_t = jnp.transpose(data_list[m], (1, 0, 2)).astype(jnp.float32)   # (ch, bs, sr)
        # feat2d[b, c*hid + j]  ->  weight row (c*hid + j)  ->  reshape (ch, hid, K)
        w_cls3 = p["w_cls"].reshape(ch, hid, classes)
        w_conf3 = p["w_conf"].reshape(ch, hid, 1)
        w_mm3 = params["w_mm"][offset:offset + ch * hid].reshape(ch, hid, classes)
        offset += ch * hid
        w_head = jnp.concatenate([w_cls3, w_conf3, w_mm3], axis=-1)        # (ch, hid, 2C+1)
        b_head = jnp.concatenate(
            [p["b_cls"], p["b_conf"], jnp.zeros((1, classes), jnp.float32)], axis=-1)
        b_pre = jnp.concatenate([p["b_info"], p["b_enc"]], axis=-1)        # (1, sr+hid)
        arrays += [x_t, p["w_info"], p["w_enc"], b_pre, w_head, b_head]
    arrays.append(params["b_mm"])
    return arrays


def mmdynamic_infer(data_list, params, *, bs, in_channel, sr, hid, classes):
    n_mod = len(in_channel)
    nh = 2 * classes + 1
    packed_w = classes + n_mod * (classes + 1)
    out_w = max(128, ((packed_w + 127) // 128) * 128)   # lane-dense packed output
    tile_b = _pick_tile_b(bs)
    grid = (bs // tile_b,)

    arrays = prepare_fused_inputs(data_list, params, in_channel=in_channel,
                                  sr=sr, hid=hid, classes=classes)

    in_specs = []
    for ch in in_channel:
        in_specs += [
            pl.BlockSpec((ch, tile_b, sr), lambda i: (0, i, 0)),        # x (channel-major)
            pl.BlockSpec((sr, sr), lambda i: (0, 0)),                   # w_info
            pl.BlockSpec((sr, hid), lambda i: (0, 0)),                  # w_enc
            pl.BlockSpec((1, sr + hid), lambda i: (0, 0)),              # b_pre
            pl.BlockSpec((ch, hid, nh), lambda i: (0, 0, 0)),           # w_head
            pl.BlockSpec((1, nh), lambda i: (0, 0)),                    # b_head
        ]
    in_specs.append(pl.BlockSpec((1, classes), lambda i: (0, 0)))       # b_mm

    kern = functools.partial(fused_kernel, tuple(in_channel), sr, hid, classes, out_w)
    packed = pl.pallas_call(
        kern,
        out_shape=jax.ShapeDtypeStruct((bs, out_w), jnp.float32),
        grid=grid,
        in_specs=in_specs,
        out_specs=pl.BlockSpec((tile_b, out_w), lambda i: (i, 0)),
        compiler_params=pltpu.CompilerParams(
            dimension_semantics=("parallel",)),   # batch tiles shard across TCs
    )(*arrays)

    mm_logit = packed[:, :classes]
    tcp_logits, tcp_confs = [], []
    col = classes
    for _ in in_channel:
        tcp_logits.append(packed[:, col:col + classes])
        col += classes
        tcp_confs.append(packed[:, col:col + 1])
        col += 1
    return mm_logit, tcp_logits, tcp_confs


# ----------------------------- parameter setup -----------------------------

def xavier_normal(key, fan_in, fan_out):
    # nn.init.xavier_normal_ std = sqrt(2 / (fan_in + fan_out)); stored as (in, out)
    std = (2.0 / (fan_in + fan_out)) ** 0.5
    return std * jax.random.normal(key, (fan_in, fan_out), dtype=jnp.float32)


def init_params(key, in_channel, sr, hid, classes):
    params = {"modalities": []}
    for ch in in_channel:
        keys = jax.random.split(key, 5)
        key = keys[0]
        p = {
            "w_info": xavier_normal(keys[1], sr, sr),
            "b_info": jnp.zeros((1, sr), jnp.float32),
            "w_enc": xavier_normal(keys[2], sr, hid),
            "b_enc": jnp.zeros((1, hid), jnp.float32),
            "w_cls": xavier_normal(keys[3], ch * hid, classes),
            "b_cls": jnp.zeros((1, classes), jnp.float32),
            "w_conf": xavier_normal(keys[4], ch * hid, 1),
            "b_conf": jnp.zeros((1, 1), jnp.float32),
        }
        params["modalities"].append(p)
    total = sum(ch * hid for ch in in_channel)
    key, k_mm = jax.random.split(key)
    params["w_mm"] = xavier_normal(k_mm, total, classes)
    params["b_mm"] = jnp.zeros((1, classes), jnp.float32)
    return params


# ----------------------------- pure-JAX reference -----------------------------

def mmdynamic_infer_ref(data_list, params, *, bs, in_channel, sr, hid, classes):
    """Reference implementation that mirrors the PyTorch forward literally."""
    feats, logits, confs = [], [], []
    for m, ch in enumerate(in_channel):
        p = params["modalities"][m]
        x = data_list[m].reshape(bs * ch, sr)
        info = jax.nn.sigmoid(x @ p["w_info"] + p["b_info"])
        h = jnp.maximum((x * info) @ p["w_enc"] + p["b_enc"], 0.0)
        feat2d = h.reshape(bs, ch * hid)
        logit = feat2d @ p["w_cls"] + p["b_cls"]
        conf = feat2d @ p["w_conf"] + p["b_conf"]
        feats.append(feat2d * conf)
        logits.append(logit)
        confs.append(conf)
    mm_feature = jnp.concatenate(feats, axis=1)
    mm_logit = mm_feature @ params["w_mm"] + params["b_mm"]
    return mm_logit, logits, confs


# ----------------------------- main -----------------------------

if __name__ == "__main__":
    # Small shapes consistent with the module's __init__:
    #   args.BATCH = 2, args.freq_time = 16, hidden_dim = [32],
    #   in_channel = [4, 2], args.n_classes = 3
    bs, sr, hid, classes = 2, 16, 32, 3
    in_channel = [4, 2]

    key = jax.random.PRNGKey(0)
    key, kd0, kd1, kp = jax.random.split(key, 4)
    data_list = [
        jax.random.normal(kd0, (bs, in_channel[0], sr), dtype=jnp.float32),
        jax.random.normal(kd1, (bs, in_channel[1], sr), dtype=jnp.float32),
    ]
    params = init_params(kp, in_channel, sr, hid, classes)

    mm_logit, tcp_logits, tcp_confs = mmdynamic_infer(
        data_list, params, bs=bs, in_channel=in_channel, sr=sr, hid=hid,
        classes=classes)
    jax.block_until_ready(mm_logit)

    ref_mm, ref_logits, ref_confs = mmdynamic_infer_ref(
        data_list, params, bs=bs, in_channel=in_channel, sr=sr, hid=hid,
        classes=classes)

    assert mm_logit.shape == (bs, classes)
    assert jnp.allclose(mm_logit, ref_mm, atol=1e-3, rtol=1e-3), "MMlogit mismatch"
    for m in range(len(in_channel)):
        assert jnp.allclose(tcp_logits[m], ref_logits[m], atol=1e-3, rtol=1e-3), (
            f"TCP logit mismatch (modality {m})")
        assert jnp.allclose(tcp_confs[m], ref_confs[m], atol=1e-3, rtol=1e-3), (
            f"TCP confidence mismatch (modality {m})")

    print("KERNEL_OK")
</pallas_src>

<mosaic_0001>
module attributes {stable_mosaic.version = 11 : i64} {
  func.func @fused_kernel(%arg0: i32, %arg1: memref<4x2x16xf32, #tpu.memory_space<vmem>>, %arg2: memref<16x16xf32, #tpu.memory_space<vmem>>, %arg3: memref<16x32xf32, #tpu.memory_space<vmem>>, %arg4: memref<1x48xf32, #tpu.memory_space<vmem>>, %arg5: memref<4x32x7xf32, #tpu.memory_space<vmem>>, %arg6: memref<1x7xf32, #tpu.memory_space<vmem>>, %arg7: memref<2x2x16xf32, #tpu.memory_space<vmem>>, %arg8: memref<16x16xf32, #tpu.memory_space<vmem>>, %arg9: memref<16x32xf32, #tpu.memory_space<vmem>>, %arg10: memref<1x48xf32, #tpu.memory_space<vmem>>, %arg11: memref<2x32x7xf32, #tpu.memory_space<vmem>>, %arg12: memref<1x7xf32, #tpu.memory_space<vmem>>, %arg13: memref<1x3xf32, #tpu.memory_space<vmem>>, %arg14: memref<2x128xf32, #tpu.memory_space<vmem>>) attributes {dimension_semantics = [#tpu.dimension_semantics<parallel>], iteration_bounds = array<i64: 1>, scalar_prefetch = 0 : i64, scratch_operands = 0 : i64, tpu.core_type = #tpu.core_type<tc>, window_params = [{transform_indices = @transform_0, window_bounds = array<i64: 4, 2, 16>}, {pipeline_mode = #tpu.pipeline_mode<synchronous>, transform_indices = @transform_1, window_bounds = array<i64: 16, 16>}, {pipeline_mode = #tpu.pipeline_mode<synchronous>, transform_indices = @transform_2, window_bounds = array<i64: 16, 32>}, {pipeline_mode = #tpu.pipeline_mode<synchronous>, transform_indices = @transform_3, window_bounds = array<i64: 1, 48>}, {pipeline_mode = #tpu.pipeline_mode<synchronous>, transform_indices = @transform_4, window_bounds = array<i64: 4, 32, 7>}, {pipeline_mode = #tpu.pipeline_mode<synchronous>, transform_indices = @transform_5, window_bounds = array<i64: 1, 7>}, {transform_indices = @transform_6, window_bounds = array<i64: 2, 2, 16>}, {pipeline_mode = #tpu.pipeline_mode<synchronous>, transform_indices = @transform_7, window_bounds = array<i64: 16, 16>}, {pipeline_mode = #tpu.pipeline_mode<synchronous>, transform_indices = @transform_8, window_bounds = array<i64: 16, 32>}, {pipeline_mode = #tpu.pipeline_mode<synchronous>, transform_indices = @transform_9, window_bounds = array<i64: 1, 48>}, {pipeline_mode = #tpu.pipeline_mode<synchronous>, transform_indices = @transform_10, window_bounds = array<i64: 2, 32, 7>}, {pipeline_mode = #tpu.pipeline_mode<synchronous>, transform_indices = @transform_11, window_bounds = array<i64: 1, 7>}, {pipeline_mode = #tpu.pipeline_mode<synchronous>, transform_indices = @transform_12, window_bounds = array<i64: 1, 3>}, {transform_indices = @transform_13, window_bounds = array<i64: 2, 128>}]} {
    %cst = arith.constant 0.000000e+00 : f32
    %0 = vector.broadcast %cst : f32 to vector<2x128xf32>
    %c0 = arith.constant 0 : index
    %c0_0 = arith.constant 0 : index
    %1 = vector.load %arg14[%c0, %c0_0] : memref<2x128xf32, #tpu.memory_space<vmem>>, vector<2x128xf32>
    tpu.vector_store %arg14[%c0, %c0_0], %0 {strides = array<i32>} : memref<2x128xf32, #tpu.memory_space<vmem>>, vector<2x128xf32>,
    %c0_1 = arith.constant 0 : index
    %c0_2 = arith.constant 0 : index
    %2 = vector.load %arg13[%c0_1, %c0_2] : memref<1x3xf32, #tpu.memory_space<vmem>>, vector<1x3xf32>
    %3 = vector.shape_cast %2 : vector<1x3xf32> to vector<1x3xf32>
    %4 = vector.broadcast %3 : vector<1x3xf32> to vector<2x3xf32>
    %c0_3 = arith.constant 0 : index
    %c0_4 = arith.constant 0 : index
    %5 = vector.load %arg2[%c0_3, %c0_4] : memref<16x16xf32, #tpu.memory_space<vmem>>, vector<16x16xf32>
    %c0_5 = arith.constant 0 : index
    %c0_6 = arith.constant 0 : index
    %6 = vector.load %arg3[%c0_5, %c0_6] : memref<16x32xf32, #tpu.memory_space<vmem>>, vector<16x32xf32>
    %c0_7 = arith.constant 0 : index
    %c0_8 = arith.constant 0 : index
    %7 = vector.load %arg4[%c0_7, %c0_8] : memref<1x48xf32, #tpu.memory_space<vmem>>, vector<1x48xf32>
    %8 = vector.extract_strided_slice %7 {offsets = [0, 0], sizes = [1, 16], strides = [1, 1]} : vector<1x48xf32> to vector<1x16xf32>
    %9 = vector.extract_strided_slice %7 {offsets = [0, 16], sizes = [1, 32], strides = [1, 1]} : vector<1x48xf32> to vector<1x32xf32>
    %c0_9 = arith.constant 0 : index
    %c0_10 = arith.constant 0 : index
    %10 = vector.load %arg6[%c0_9, %c0_10] : memref<1x7xf32, #tpu.memory_space<vmem>>, vector<1x7xf32>
    %11 = vector.shape_cast %10 : vector<1x7xf32> to vector<1x7xf32>
    %12 = vector.broadcast %11 : vector<1x7xf32> to vector<2x7xf32>
    %c0_11 = arith.constant 0 : index
    %c0_12 = arith.constant 0 : index
    %c0_13 = arith.constant 0 : index
    %13 = vector.load %arg1[%c0_11, %c0_12, %c0_13] : memref<4x2x16xf32, #tpu.memory_space<vmem>>, vector<1x2x16xf32>
    %14 = vector.shape_cast %13 : vector<1x2x16xf32> to vector<2x16xf32>
    %cst_14 = arith.constant dense<0.000000e+00> : vector<2x16xf32>
    %15 = tpu.matmul %14, %5, %cst_14 {dimension_numbers = #tpu.dot_dimension_numbers<[1], [0], [0], [1], [0, 0, 1, 1], [], []>} : vector<2x16xf32>, vector<16x16xf32>, vector<2x16xf32> -> vector<2x16xf32>
    %16 = vector.broadcast %8 : vector<1x16xf32> to vector<2x16xf32>
    %17 = arith.addf %15, %16 : vector<2x16xf32>
    %18 = arith.negf %17 : vector<2x16xf32>
    %19 = math.exp %18 : vector<2x16xf32>
    %cst_15 = arith.constant 1.000000e+00 : f32
    %20 = vector.broadcast %cst_15 : f32 to vector<2x16xf32>
    %21 = arith.addf %20, %19 : vector<2x16xf32>
    %22 = arith.divf %20, %21 : vector<2x16xf32>
    %23 = arith.mulf %14, %22 : vector<2x16xf32>
    %cst_16 = arith.constant dense<0.000000e+00> : vector<2x32xf32>
    %24 = tpu.matmul %23, %6, %cst_16 {dimension_numbers = #tpu.dot_dimension_numbers<[1], [0], [0], [1], [0, 0, 1, 1], [], []>} : vector<2x16xf32>, vector<16x32xf32>, vector<2x32xf32> -> vector<2x32xf32>
    %25 = vector.broadcast %9 : vector<1x32xf32> to vector<2x32xf32>
    %26 = arith.addf %24, %25 : vector<2x32xf32>
    %cst_17 = arith.constant 0.000000e+00 : f32
    %27 = vector.broadcast %cst_17 : f32 to vector<2x32xf32>
    %28 = arith.maximumf %26, %27 : vector<2x32xf32>
    %c0_18 = arith.constant 0 : index
    %c0_19 = arith.constant 0 : index
    %c0_20 = arith.constant 0 : index
    %29 = vector.load %arg5[%c0_18, %c0_19, %c0_20] : memref<4x32x7xf32, #tpu.memory_space<vmem>>, vector<1x32x7xf32>
    %30 = vector.shape_cast %29 : vector<1x32x7xf32> to vector<32x7xf32>
    %cst_21 = arith.constant dense<0.000000e+00> : vector<2x7xf32>
    %31 = tpu.matmul %28, %30, %cst_21 {dimension_numbers = #tpu.dot_dimension_numbers<[1], [0], [0], [1], [0, 0, 1, 1], [], []>} : vector<2x32xf32>, vector<32x7xf32>, vector<2x7xf32> -> vector<2x7xf32>
    %32 = arith.addf %12, %31 : vector<2x7xf32>
    %c1 = arith.constant 1 : index
    %c0_22 = arith.constant 0 : index
    %c0_23 = arith.constant 0 : index
    %33 = vector.load %arg1[%c1, %c0_22, %c0_23] : memref<4x2x16xf32, #tpu.memory_space<vmem>>, vector<1x2x16xf32>
    %34 = vector.shape_cast %33 : vector<1x2x16xf32> to vector<2x16xf32>
    %cst_24 = arith.constant dense<0.000000e+00> : vector<2x16xf32>
    %35 = tpu.matmul %34, %5, %cst_24 {dimension_numbers = #tpu.dot_dimension_numbers<[1], [0], [0], [1], [0, 0, 1, 1], [], []>} : vector<2x16xf32>, vector<16x16xf32>, vector<2x16xf32> -> vector<2x16xf32>
    %36 = vector.broadcast %8 : vector<1x16xf32> to vector<2x16xf32>
    %37 = arith.addf %35, %36 : vector<2x16xf32>
    %38 = arith.negf %37 : vector<2x16xf32>
    %39 = math.exp %38 : vector<2x16xf32>
    %cst_25 = arith.constant 1.000000e+00 : f32
    %40 = vector.broadcast %cst_25 : f32 to vector<2x16xf32>
    %41 = arith.addf %40, %39 : vector<2x16xf32>
    %42 = arith.divf %40, %41 : vector<2x16xf32>
    %43 = arith.mulf %34, %42 : vector<2x16xf32>
    %cst_26 = arith.constant dense<0.000000e+00> : vector<2x32xf32>
    %44 = tpu.matmul %43, %6, %cst_26 {dimension_numbers = #tpu.dot_dimension_numbers<[1], [0], [0], [1], [0, 0, 1, 1], [], []>} : vector<2x16xf32>, vector<16x32xf32>, vector<2x32xf32> -> vector<2x32xf32>
    %45 = vector.broadcast %9 : vector<1x32xf32> to vector<2x32xf32>
    %46 = arith.addf %44, %45 : vector<2x32xf32>
    %cst_27 = arith.constant 0.000000e+00 : f32
    %47 = vector.broadcast %cst_27 : f32 to vector<2x32xf32>
    %48 = arith.maximumf %46, %47 : vector<2x32xf32>
    %c1_28 = arith.constant 1 : index
    %c0_29 = arith.constant 0 : index
    %c0_30 = arith.constant 0 : index
    %49 = vector.load %arg5[%c1_28, %c0_29, %c0_30] : memref<4x32x7xf32, #tpu.memory_space<vmem>>, vector<1x32x7xf32>
    %50 = vector.shape_cast %49 : vector<1x32x7xf32> to vector<32x7xf32>
    %cst_31 = arith.constant dense<0.000000e+00> : vector<2x7xf32>
    %51 = tpu.matmul %48, %50, %cst_31 {dimension_numbers = #tpu.dot_dimension_numbers<[1], [0], [0], [1], [0, 0, 1, 1], [], []>} : vector<2x32xf32>, vector<32x7xf32>, vector<2x7xf32> -> vector<2x7xf32>
    %52 = arith.addf %32, %51 : vector<2x7xf32>
    %c2 = arith.constant 2 : index
    %c0_32 = arith.constant 0 : index
    %c0_33 = arith.constant 0 : index
    %53 = vector.load %arg1[%c2, %c0_32, %c0_33] : memref<4x2x16xf32, #tpu.memory_space<vmem>>, vector<1x2x16xf32>
    %54 = vector.shape_cast %53 : vector<1x2x16xf32> to vector<2x16xf32>
    %cst_34 = arith.constant dense<0.000000e+00> : vector<2x16xf32>
    %55 = tpu.matmul %54, %5, %cst_34 {dimension_numbers = #tpu.dot_dimension_numbers<[1], [0], [0], [1], [0, 0, 1, 1], [], []>} : vector<2x16xf32>, vector<16x16xf32>, vector<2x16xf32> -> vector<2x16xf32>
    %56 = vector.broadcast %8 : vector<1x16xf32> to vector<2x16xf32>
    %57 = arith.addf %55, %56 : vector<2x16xf32>
    %58 = arith.negf %57 : vector<2x16xf32>
    %59 = math.exp %58 : vector<2x16xf32>
    %cst_35 = arith.constant 1.000000e+00 : f32
    %60 = vector.broadcast %cst_35 : f32 to vector<2x16xf32>
    %61 = arith.addf %60, %59 : vector<2x16xf32>
    %62 = arith.divf %60, %61 : vector<2x16xf32>
    %63 = arith.mulf %54, %62 : vector<2x16xf32>
    %cst_36 = arith.constant dense<0.000000e+00> : vector<2x32xf32>
    %64 = tpu.matmul %63, %6, %cst_36 {dimension_numbers = #tpu.dot_dimension_numbers<[1], [0], [0], [1], [0, 0, 1, 1], [], []>} : vector<2x16xf32>, vector<16x32xf32>, vector<2x32xf32> -> vector<2x32xf32>
    %65 = vector.broadcast %9 : vector<1x32xf32> to vector<2x32xf32>
    %66 = arith.addf %64, %65 : vector<2x32xf32>
    %cst_37 = arith.constant 0.000000e+00 : f32
    %67 = vector.broadcast %cst_37 : f32 to vector<2x32xf32>
    %68 = arith.maximumf %66, %67 : vector<2x32xf32>
    %c2_38 = arith.constant 2 : index
    %c0_39 = arith.constant 0 : index
    %c0_40 = arith.constant 0 : index
    %69 = vector.load %arg5[%c2_38, %c0_39, %c0_40] : memref<4x32x7xf32, #tpu.memory_space<vmem>>, vector<1x32x7xf32>
    %70 = vector.shape_cast %69 : vector<1x32x7xf32> to vector<32x7xf32>
    %cst_41 = arith.constant dense<0.000000e+00> : vector<2x7xf32>
    %71 = tpu.matmul %68, %70, %cst_41 {dimension_numbers = #tpu.dot_dimension_numbers<[1], [0], [0], [1], [0, 0, 1, 1], [], []>} : vector<2x32xf32>, vector<32x7xf32>, vector<2x7xf32> -> vector<2x7xf32>
    %72 = arith.addf %52, %71 : vector<2x7xf32>
    %c3 = arith.constant 3 : index
    %c0_42 = arith.constant 0 : index
    %c0_43 = arith.constant 0 : index
    %73 = vector.load %arg1[%c3, %c0_42, %c0_43] : memref<4x2x16xf32, #tpu.memory_space<vmem>>, vector<1x2x16xf32>
    %74 = vector.shape_cast %73 : vector<1x2x16xf32> to vector<2x16xf32>
    %cst_44 = arith.constant dense<0.000000e+00> : vector<2x16xf32>
    %75 = tpu.matmul %74, %5, %cst_44 {dimension_numbers = #tpu.dot_dimension_numbers<[1], [0], [0], [1], [0, 0, 1, 1], [], []>} : vector<2x16xf32>, vector<16x16xf32>, vector<2x16xf32> -> vector<2x16xf32>
    %76 = vector.broadcast %8 : vector<1x16xf32> to vector<2x16xf32>
    %77 = arith.addf %75, %76 : vector<2x16xf32>
    %78 = arith.negf %77 : vector<2x16xf32>
    %79 = math.exp %78 : vector<2x16xf32>
    %cst_45 = arith.constant 1.000000e+00 : f32
    %80 = vector.broadcast %cst_45 : f32 to vector<2x16xf32>
    %81 = arith.addf %80, %79 : vector<2x16xf32>
    %82 = arith.divf %80, %81 : vector<2x16xf32>
    %83 = arith.mulf %74, %82 : vector<2x16xf32>
    %cst_46 = arith.constant dense<0.000000e+00> : vector<2x32xf32>
    %84 = tpu.matmul %83, %6, %cst_46 {dimension_numbers = #tpu.dot_dimension_numbers<[1], [0], [0], [1], [0, 0, 1, 1], [], []>} : vector<2x16xf32>, vector<16x32xf32>, vector<2x32xf32> -> vector<2x32xf32>
    %85 = vector.broadcast %9 : vector<1x32xf32> to vector<2x32xf32>
    %86 = arith.addf %84, %85 : vector<2x32xf32>
    %cst_47 = arith.constant 0.000000e+00 : f32
    %87 = vector.broadcast %cst_47 : f32 to vector<2x32xf32>
    %88 = arith.maximumf %86, %87 : vector<2x32xf32>
    %c3_48 = arith.constant 3 : index
    %c0_49 = arith.constant 0 : index
    %c0_50 = arith.constant 0 : index
    %89 = vector.load %arg5[%c3_48, %c0_49, %c0_50] : memref<4x32x7xf32, #tpu.memory_space<vmem>>, vector<1x32x7xf32>
    %90 = vector.shape_cast %89 : vector<1x32x7xf32> to vector<32x7xf32>
    %cst_51 = arith.constant dense<0.000000e+00> : vector<2x7xf32>
    %91 = tpu.matmul %88, %90, %cst_51 {dimension_numbers = #tpu.dot_dimension_numbers<[1], [0], [0], [1], [0, 0, 1, 1], [], []>} : vector<2x32xf32>, vector<32x7xf32>, vector<2x7xf32> -> vector<2x7xf32>
    %92 = arith.addf %72, %91 : vector<2x7xf32>
    %93 = vector.extract_strided_slice %92 {offsets = [0, 0], sizes = [2, 3], strides = [1, 1]} : vector<2x7xf32> to vector<2x3xf32>
    %94 = vector.extract_strided_slice %92 {offsets = [0, 3], sizes = [2, 1], strides = [1, 1]} : vector<2x7xf32> to vector<2x1xf32>
    %95 = vector.extract_strided_slice %92 {offsets = [0, 4], sizes = [2, 3], strides = [1, 1]} : vector<2x7xf32> to vector<2x3xf32>
    %96 = vector.broadcast %94 : vector<2x1xf32> to vector<2x3xf32>
    %97 = arith.mulf %96, %95 : vector<2x3xf32>
    %98 = arith.addf %4, %97 : vector<2x3xf32>
    %c0_52 = arith.constant 0 : index
    %c3_53 = arith.constant 3 : index
    %99 = vector.load %arg14[%c0_52, %c3_53] : memref<2x128xf32, #tpu.memory_space<vmem>>, vector<2x3xf32>
    tpu.vector_store %arg14[%c0_52, %c3_53], %93 {strides = array<i32>} : memref<2x128xf32, #tpu.memory_space<vmem>>, vector<2x3xf32>,
    %c0_54 = arith.constant 0 : index
    %c6 = arith.constant 6 : index
    %100 = vector.load %arg14[%c0_54, %c6] : memref<2x128xf32, #tpu.memory_space<vmem>>, vector<2x1xf32>
    tpu.vector_store %arg14[%c0_54, %c6], %94 {strides = array<i32>} : memref<2x128xf32, #tpu.memory_space<vmem>>, vector<2x1xf32>,
    %c0_55 = arith.constant 0 : index
    %c0_56 = arith.constant 0 : index
    %101 = vector.load %arg8[%c0_55, %c0_56] : memref<16x16xf32, #tpu.memory_space<vmem>>, vector<16x16xf32>
    %c0_57 = arith.constant 0 : index
    %c0_58 = arith.constant 0 : index
    %102 = vector.load %arg9[%c0_57, %c0_58] : memref<16x32xf32, #tpu.memory_space<vmem>>, vector<16x32xf32>
    %c0_59 = arith.constant 0 : index
    %c0_60 = arith.constant 0 : index
    %103 = vector.load %arg10[%c0_59, %c0_60] : memref<1x48xf32, #tpu.memory_space<vmem>>, vector<1x48xf32>
    %104 = vector.extract_strided_slice %103 {offsets = [0, 0], sizes = [1, 16], strides = [1, 1]} : vector<1x48xf32> to vector<1x16xf32>
    %105 = vector.extract_strided_slice %103 {offsets = [0, 16], sizes = [1, 32], strides = [1, 1]} : vector<1x48xf32> to vector<1x32xf32>
    %c0_61 = arith.constant 0 : index
    %c0_62 = arith.constant 0 : index
    %106 = vector.load %arg12[%c0_61, %c0_62] : memref<1x7xf32, #tpu.memory_space<vmem>>, vector<1x7xf32>
    %107 = vector.shape_cast %106 : vector<1x7xf32> to vector<1x7xf32>
    %108 = vector.broadcast %107 : vector<1x7xf32> to vector<2x7xf32>
    %c0_63 = arith.constant 0 : index
    %c0_64 = arith.constant 0 : index
    %c0_65 = arith.constant 0 : index
    %109 = vector.load %arg7[%c0_63, %c0_64, %c0_65] : memref<2x2x16xf32, #tpu.memory_space<vmem>>, vector<1x2x16xf32>
    %110 = vector.shape_cast %109 : vector<1x2x16xf32> to vector<2x16xf32>
    %cst_66 = arith.constant dense<0.000000e+00> : vector<2x16xf32>
    %111 = tpu.matmul %110, %101, %cst_66 {dimension_numbers = #tpu.dot_dimension_numbers<[1], [0], [0], [1], [0, 0, 1, 1], [], []>} : vector<2x16xf32>, vector<16x16xf32>, vector<2x16xf32> -> vector<2x16xf32>
    %112 = vector.broadcast %104 : vector<1x16xf32> to vector<2x16xf32>
    %113 = arith.addf %111, %112 : vector<2x16xf32>
    %114 = arith.negf %113 : vector<2x16xf32>
    %115 = math.exp %114 : vector<2x16xf32>
    %cst_67 = arith.constant 1.000000e+00 : f32
    %116 = vector.broadcast %cst_67 : f32 to vector<2x16xf32>
    %117 = arith.addf %116, %115 : vector<2x16xf32>
    %118 = arith.divf %116, %117 : vector<2x16xf32>
    %119 = arith.mulf %110, %118 : vector<2x16xf32>
    %cst_68 = arith.constant dense<0.000000e+00> : vector<2x32xf32>
    %120 = tpu.matmul %119, %102, %cst_68 {dimension_numbers = #tpu.dot_dimension_numbers<[1], [0], [0], [1], [0, 0, 1, 1], [], []>} : vector<2x16xf32>, vector<16x32xf32>, vector<2x32xf32> -> vector<2x32xf32>
    %121 = vector.broadcast %105 : vector<1x32xf32> to vector<2x32xf32>
    %122 = arith.addf %120, %121 : vector<2x32xf32>
    %cst_69 = arith.constant 0.000000e+00 : f32
    %123 = vector.broadcast %cst_69 : f32 to vector<2x32xf32>
    %124 = arith.maximumf %122, %123 : vector<2x32xf32>
    %c0_70 = arith.constant 0 : index
    %c0_71 = arith.constant 0 : index
    %c0_72 = arith.constant 0 : index
    %125 = vector.load %arg11[%c0_70, %c0_71, %c0_72] : memref<2x32x7xf32, #tpu.memory_space<vmem>>, vector<1x32x7xf32>
    %126 = vector.shape_cast %125 : vector<1x32x7xf32> to vector<32x7xf32>
    %cst_73 = arith.constant dense<0.000000e+00> : vector<2x7xf32>
    %127 = tpu.matmul %124, %126, %cst_73 {dimension_numbers = #tpu.dot_dimension_numbers<[1], [0], [0], [1], [0, 0, 1, 1], [], []>} : vector<2x32xf32>, vector<32x7xf32>, vector<2x7xf32> -> vector<2x7xf32>
    %128 = arith.addf %108, %127 : vector<2x7xf32>
    %c1_74 = arith.constant 1 : index
    %c0_75 = arith.constant 0 : index
    %c0_76 = arith.constant 0 : index
    %129 = vector.load %arg7[%c1_74, %c0_75, %c0_76] : memref<2x2x16xf32, #tpu.memory_space<vmem>>, vector<1x2x16xf32>
    %130 = vector.shape_cast %129 : vector<1x2x16xf32> to vector<2x16xf32>
    %cst_77 = arith.constant dense<0.000000e+00> : vector<2x16xf32>
    %131 = tpu.matmul %130, %101, %cst_77 {dimension_numbers = #tpu.dot_dimension_numbers<[1], [0], [0], [1], [0, 0, 1, 1], [], []>} : vector<2x16xf32>, vector<16x16xf32>, vector<2x16xf32> -> vector<2x16xf32>
    %132 = vector.broadcast %104 : vector<1x16xf32> to vector<2x16xf32>
    %133 = arith.addf %131, %132 : vector<2x16xf32>
    %134 = arith.negf %133 : vector<2x16xf32>
    %135 = math.exp %134 : vector<2x16xf32>
    %cst_78 = arith.constant 1.000000e+00 : f32
    %136 = vector.broadcast %cst_78 : f32 to vector<2x16xf32>
    %137 = arith.addf %136, %135 : vector<2x16xf32>
    %138 = arith.divf %136, %137 : vector<2x16xf32>
    %139 = arith.mulf %130, %138 : vector<2x16xf32>
    %cst_79 = arith.constant dense<0.000000e+00> : vector<2x32xf32>
    %140 = tpu.matmul %139, %102, %cst_79 {dimension_numbers = #tpu.dot_dimension_numbers<[1], [0], [0], [1], [0, 0, 1, 1], [], []>} : vector<2x16xf32>, vector<16x32xf32>, vector<2x32xf32> -> vector<2x32xf32>
    %141 = vector.broadcast %105 : vector<1x32xf32> to vector<2x32xf32>
    %142 = arith.addf %140, %141 : vector<2x32xf32>
    %cst_80 = arith.constant 0.000000e+00 : f32
    %143 = vector.broadcast %cst_80 : f32 to vector<2x32xf32>
    %144 = arith.maximumf %142, %143 : vector<2x32xf32>
    %c1_81 = arith.constant 1 : index
    %c0_82 = arith.constant 0 : index
    %c0_83 = arith.constant 0 : index
    %145 = vector.load %arg11[%c1_81, %c0_82, %c0_83] : memref<2x32x7xf32, #tpu.memory_space<vmem>>, vector<1x32x7xf32>
    %146 = vector.shape_cast %145 : vector<1x32x7xf32> to vector<32x7xf32>
    %cst_84 = arith.constant dense<0.000000e+00> : vector<2x7xf32>
    %147 = tpu.matmul %144, %146, %cst_84 {dimension_numbers = #tpu.dot_dimension_numbers<[1], [0], [0], [1], [0, 0, 1, 1], [], []>} : vector<2x32xf32>, vector<32x7xf32>, vector<2x7xf32> -> vector<2x7xf32>
    %148 = arith.addf %128, %147 : vector<2x7xf32>
    %149 = vector.extract_strided_slice %148 {offsets = [0, 0], sizes = [2, 3], strides = [1, 1]} : vector<2x7xf32> to vector<2x3xf32>
    %150 = vector.extract_strided_slice %148 {offsets = [0, 3], sizes = [2, 1], strides = [1, 1]} : vector<2x7xf32> to vector<2x1xf32>
    %151 = vector.extract_strided_slice %148 {offsets = [0, 4], sizes = [2, 3], strides = [1, 1]} : vector<2x7xf32> to vector<2x3xf32>
    %152 = vector.broadcast %150 : vector<2x1xf32> to vector<2x3xf32>
    %153 = arith.mulf %152, %151 : vector<2x3xf32>
    %154 = arith.addf %98, %153 : vector<2x3xf32>
    %c0_85 = arith.constant 0 : index
    %c7 = arith.constant 7 : index
    %155 = vector.load %arg14[%c0_85, %c7] : memref<2x128xf32, #tpu.memory_space<vmem>>, vector<2x3xf32>
    tpu.vector_store %arg14[%c0_85, %c7], %149 {strides = array<i32>} : memref<2x128xf32, #tpu.memory_space<vmem>>, vector<2x3xf32>,
    %c0_86 = arith.constant 0 : index
    %c10 = arith.constant 10 : index
    %156 = vector.load %arg14[%c0_86, %c10] : memref<2x128xf32, #tpu.memory_space<vmem>>, vector<2x1xf32>
    tpu.vector_store %arg14[%c0_86, %c10], %150 {strides = array<i32>} : memref<2x128xf32, #tpu.memory_space<vmem>>, vector<2x1xf32>,
    %c0_87 = arith.constant 0 : index
    %c0_88 = arith.constant 0 : index
    %157 = vector.load %arg14[%c0_87, %c0_88] : memref<2x128xf32, #tpu.memory_space<vmem>>, vector<2x3xf32>
    tpu.vector_store %arg14[%c0_87, %c0_88], %154 {strides = array<i32>} : memref<2x128xf32, #tpu.memory_space<vmem>>, vector<2x3xf32>,
    return
  }
  func.func @transform_0(%arg0: i32) -> (i32, i32, i32) {
    %c0_i32 = arith.constant 0 : i32
    %c0_i32_0 = arith.constant 0 : i32
    %c0_i32_1 = arith.constant 0 : i32
    return %c0_i32, %arg0, %c0_i32_0 : i32, i32, i32
  }
  func.func @transform_1(%arg0: i32) -> (i32, i32) {
    %c0_i32 = arith.constant 0 : i32
    %c0_i32_0 = arith.constant 0 : i32
    %c0_i32_1 = arith.constant 0 : i32
    return %c0_i32, %c0_i32_0 : i32, i32
  }
  func.func @transform_2(%arg0: i32) -> (i32, i32) {
    %c0_i32 = arith.constant 0 : i32
    %c0_i32_0 = arith.constant 0 : i32
    %c0_i32_1 = arith.constant 0 : i32
    return %c0_i32, %c0_i32_0 : i32, i32
  }
  func.func @transform_3(%arg0: i32) -> (i32, i32) {
    %c0_i32 = arith.constant 0 : i32
    %c0_i32_0 = arith.constant 0 : i32
    %c0_i32_1 = arith.constant 0 : i32
    return %c0_i32, %c0_i32_0 : i32, i32
  }
  func.func @transform_4(%arg0: i32) -> (i32, i32, i32) {
    %c0_i32 = arith.constant 0 : i32
    %c0_i32_0 = arith.constant 0 : i32
    %c0_i32_1 = arith.constant 0 : i32
    %c0_i32_2 = arith.constant 0 : i32
    return %c0_i32, %c0_i32_0, %c0_i32_1 : i32, i32, i32
  }
  func.func @transform_5(%arg0: i32) -> (i32, i32) {
    %c0_i32 = arith.constant 0 : i32
    %c0_i32_0 = arith.constant 0 : i32
    %c0_i32_1 = arith.constant 0 : i32
    return %c0_i32, %c0_i32_0 : i32, i32
  }
  func.func @transform_6(%arg0: i32) -> (i32, i32, i32) {
    %c0_i32 = arith.constant 0 : i32
    %c0_i32_0 = arith.constant 0 : i32
    %c0_i32_1 = arith.constant 0 : i32
    return %c0_i32, %arg0, %c0_i32_0 : i32, i32, i32
  }
  func.func @transform_7(%arg0: i32) -> (i32, i32) {
    %c0_i32 = arith.constant 0 : i32
    %c0_i32_0 = arith.constant 0 : i32
    %c0_i32_1 = arith.constant 0 : i32
    return %c0_i32, %c0_i32_0 : i32, i32
  }
  func.func @transform_8(%arg0: i32) -> (i32, i32) {
    %c0_i32 = arith.constant 0 : i32
    %c0_i32_0 = arith.constant 0 : i32
    %c0_i32_1 = arith.constant 0 : i32
    return %c0_i32, %c0_i32_0 : i32, i32
  }
  func.func @transform_9(%arg0: i32) -> (i32, i32) {
    %c0_i32 = arith.constant 0 : i32
    %c0_i32_0 = arith.constant 0 : i32
    %c0_i32_1 = arith.constant 0 : i32
    return %c0_i32, %c0_i32_0 : i32, i32
  }
  func.func @transform_10(%arg0: i32) -> (i32, i32, i32) {
    %c0_i32 = arith.constant 0 : i32
    %c0_i32_0 = arith.constant 0 : i32
    %c0_i32_1 = arith.constant 0 : i32
    %c0_i32_2 = arith.constant 0 : i32
    return %c0_i32, %c0_i32_0, %c0_i32_1 : i32, i32, i32
  }
  func.func @transform_11(%arg0: i32) -> (i32, i32) {
    %c0_i32 = arith.constant 0 : i32
    %c0_i32_0 = arith.constant 0 : i32
    %c0_i32_1 = arith.constant 0 : i32
    return %c0_i32, %c0_i32_0 : i32, i32
  }
  func.func @transform_12(%arg0: i32) -> (i32, i32) {
    %c0_i32 = arith.constant 0 : i32
    %c0_i32_0 = arith.constant 0 : i32
    %c0_i32_1 = arith.constant 0 : i32
    return %c0_i32, %c0_i32_0 : i32, i32
  }
  func.func @transform_13(%arg0: i32) -> (i32, i32) {
    %c0_i32 = arith.constant 0 : i32
    %c0_i32_0 = arith.constant 0 : i32
    return %arg0, %c0_i32 : i32, i32
  }
}

</mosaic_0001>

<llo_original>
// kernel: tpu_custom_call.1
$region0: #{tpu_custom_call.1}
  #allocation0 [shape = 'u32[]', space=smem, size = 0x4, offset = 0x4, fixed_abs, tag = 'smem constant byte address 0x4 - core index']
  #allocation1 [shape = 'u32[144,128]{1,0:T(1,128)}', space=vmem, size = 0x12000, scoped, tag = 'internal scratch']
  %s0 = inlined_call_operand.vmem [shape: f32[4,2,16], index: 0, kind: input, shape index: {}]
  %s1 = inlined_call_operand.vmem [shape: f32[16,16], index: 1, kind: input, shape index: {}]
  %s2 = inlined_call_operand.vmem [shape: f32[16,32], index: 2, kind: input, shape index: {}]
  %s3 = inlined_call_operand.vmem [shape: f32[1,48], index: 3, kind: input, shape index: {}]
  %s4 = inlined_call_operand.vmem [shape: f32[4,32,7], index: 4, kind: input, shape index: {}]
  %s5 = inlined_call_operand.vmem [shape: f32[1,7], index: 5, kind: input, shape index: {}]
  %s6 = inlined_call_operand.vmem [shape: f32[2,2,16], index: 6, kind: input, shape index: {}]
  %s7 = inlined_call_operand.vmem [shape: f32[16,16], index: 7, kind: input, shape index: {}]
  %s8 = inlined_call_operand.vmem [shape: f32[16,32], index: 8, kind: input, shape index: {}]
  %s9 = inlined_call_operand.vmem [shape: f32[1,48], index: 9, kind: input, shape index: {}]
  %s10 = inlined_call_operand.vmem [shape: f32[2,32,7], index: 10, kind: input, shape index: {}]
  %s11 = inlined_call_operand.vmem [shape: f32[1,7], index: 11, kind: input, shape index: {}]
  %s12 = inlined_call_operand.vmem [shape: f32[1,3], index: 12, kind: input, shape index: {}]
  %s13 = inlined_call_operand.hbm [shape: f32[2,128], index: 13, kind: output, shape index: {}]
  %s14 = sld [smem:[#allocation0]]
  $region62: #{tpu_custom_call.1} parent=0
    _
  %s16 = ssub.s32 1, %s14
  %s17 = scalar_select 0, %s16, %s14
  $region1: #{tpu_custom_call.1} parent=0
    #allocation2 [shape = 'u8[1024]{0}', space=vmem, size = 0x400, scoped, tag = 'output window, operand 0, single buffered']
    #allocation3 [shape = 's32[1]{0}', space=sflag, size = 0x4, scoped, tag = 'scoped memory for tpu_custom_call.1']
    %18 = vsyncpa [#allocation3], 0
    // Predicated region
    $region2: #{tpu_custom_call.1} parent=1 // pred_check
      _
    $region3: #{tpu_custom_call.1} parent=1 // pred_check_branch
      %20 = sbr.rel (0) target = $region5
    $region4: #{tpu_custom_call.1} parent=1 // pred_region
      _
    $region5: #{tpu_custom_call.1} parent=1 // pred_fallthru
      _
    // Predicated region
    $region6: #{tpu_custom_call.1} parent=1 // pred_check
      _
    $region7: #{tpu_custom_call.1} parent=1 // pred_check_branch
      %22 = sbr.rel (0) target = $region9
    $region8: #{tpu_custom_call.1} parent=1 // pred_region
      _
    $region9: #{tpu_custom_call.1} parent=1 // pred_fallthru
      _
    // Predicated region
    $region10: #{tpu_custom_call.1} parent=1 // pred_check
      _
    $region11: #{tpu_custom_call.1} parent=1 // pred_check_branch
      %24 = sbr.rel (0) target = $region13
    $region12: #{tpu_custom_call.1} parent=1 // pred_region
      _
    $region13: #{tpu_custom_call.1} parent=1 // pred_fallthru
      _
    // Predicated region
    $region14: #{tpu_custom_call.1} parent=1 // pred_check
      _
    $region15: #{tpu_custom_call.1} parent=1 // pred_check_branch
      %26 = sbr.rel (0) target = $region17
    $region16: #{tpu_custom_call.1} parent=1 // pred_region
      _
    $region17: #{tpu_custom_call.1} parent=1 // pred_fallthru
      _
    // Predicated region
    $region18: #{tpu_custom_call.1} parent=1 // pred_check
      _
    $region19: #{tpu_custom_call.1} parent=1 // pred_check_branch
      %28 = sbr.rel (0) target = $region21
    $region20: #{tpu_custom_call.1} parent=1 // pred_region
      _
    $region21: #{tpu_custom_call.1} parent=1 // pred_fallthru
      _
    // Predicated region
    $region22: #{tpu_custom_call.1} parent=1 // pred_check
      _
    $region23: #{tpu_custom_call.1} parent=1 // pred_check_branch
      %30 = sbr.rel (0) target = $region25
    $region24: #{tpu_custom_call.1} parent=1 // pred_region
      _
    $region25: #{tpu_custom_call.1} parent=1 // pred_fallthru
      _
    // Predicated region
    $region26: #{tpu_custom_call.1} parent=1 // pred_check
      _
    $region27: #{tpu_custom_call.1} parent=1 // pred_check_branch
      %32 = sbr.rel (0) target = $region29
    $region28: #{tpu_custom_call.1} parent=1 // pred_region
      _
    $region29: #{tpu_custom_call.1} parent=1 // pred_fallthru
      _
    // Predicated region
    $region30: #{tpu_custom_call.1} parent=1 // pred_check
      _
    $region31: #{tpu_custom_call.1} parent=1 // pred_check_branch
      %34 = sbr.rel (0) target = $region33
    $region32: #{tpu_custom_call.1} parent=1 // pred_region
      _
    $region33: #{tpu_custom_call.1} parent=1 // pred_fallthru
      _
    // Predicated region
    $region34: #{tpu_custom_call.1} parent=1 // pred_check
      _
    $region35: #{tpu_custom_call.1} parent=1 // pred_check_branch
      %36 = sbr.rel (0) target = $region37
    $region36: #{tpu_custom_call.1} parent=1 // pred_region
      _
    $region37: #{tpu_custom_call.1} parent=1 // pred_fallthru
      _
    // Predicated region
    $region38: #{tpu_custom_call.1} parent=1 // pred_check
      _
    $region39: #{tpu_custom_call.1} parent=1 // pred_check_branch
      %38 = sbr.rel (0) target = $region41
    $region40: #{tpu_custom_call.1} parent=1 // pred_region
      _
    $region41: #{tpu_custom_call.1} parent=1 // pred_fallthru
      _
    // Predicated region
    $region42: #{tpu_custom_call.1} parent=1 // pred_check
      _
    $region43: #{tpu_custom_call.1} parent=1 // pred_check_branch
      %40 = sbr.rel (0) target = $region45
    $region44: #{tpu_custom_call.1} parent=1 // pred_region
      _
    $region45: #{tpu_custom_call.1} parent=1 // pred_fallthru
      _
    // Predicated region
    $region46: #{tpu_custom_call.1} parent=1 // pred_check
      _
    $region47: #{tpu_custom_call.1} parent=1 // pred_check_branch
      %42 = sbr.rel (0) target = $region49
    $region48: #{tpu_custom_call.1} parent=1 // pred_region
      _
    $region49: #{tpu_custom_call.1} parent=1 // pred_fallthru
      _
    // Predicated region
    $region50: #{tpu_custom_call.1} parent=1 // pred_check
      _
    $region51: #{tpu_custom_call.1} parent=1 // pred_check_branch
      %44 = sbr.rel (0) target = $region53
    $region52: #{tpu_custom_call.1} parent=1 // pred_region
      _
    $region53: #{tpu_custom_call.1} parent=1 // pred_fallthru
      _
    %45 = vst [vmem:[#allocation2] sm:$0x3] 0.0
    %v46 = vld [vmem:[%s12] sm:$0x1]
    %v48 = vlaneseq
    %v49 = vshrl.u32 %v48, 7
    %v50 = vsub.s32 0, %v49
    %v51 = vrot.slane %v46, %v50
    %v53 = vld [vmem:[%s1] sm:$0xff]
    %v54 = vld [vmem:[%s1 + $0x8] sm:$0xff]
    %v55 = vld [vmem:[%s2] sm:$0xff]
    %v56 = vld [vmem:[%s2 + $0x8] sm:$0xff]
    %v57 = vld [vmem:[%s3] sm:$0x1]
    %v58 = vld [vmem:[%s5] sm:$0x1]
    %v60 = vlaneseq
    %v61 = vshrl.u32 %v60, 7
    %v62 = vsub.s32 0, %v61
    %v63 = vrot.slane %v58, %v62
    %v65 = vld [vmem:[%s0] sm:$0x3]
    %v67 = vlaneseq
    %v68 = vshrl.u32 %v67, 7
    %v69 = vsub.s32 0, %v68
    %v70 = vrot.slane %v57, %v69
    %vm72 = vcmask 130048
    %v74 = vsel %vm72, %v65, 0
    %76 = vmatprep.subr.mxu0 0.0
    %77 = vmatpush1.msra.mxu0 %v53
    %78 = vmatprep.subr.mxu0 0.0
    %79 = vmatpush1.msra.mxu0 %v54
    %80 = vmatprep.subr.mxu0 0.0
    %81 = vmatpush1.msra.mxu0 0.0
    %82 = vmatprep.subr.mxu0 0.0
    %83 = vmatpush1.msra.mxu0 0.0
    %84 = vmatprep.subr.mxu0 0.0
    %85 = vmatpush1.msra.mxu0 0.0
    %86 = vmatprep.subr.mxu0 0.0
    %87 = vmatpush1.msra.mxu0 0.0
    %88 = vmatprep.subr.mxu0 0.0
    %89 = vmatpush1.msra.mxu0 0.0
    %90 = vmatprep.subr.mxu0 0.0
    %91 = vmatpush1.msra.mxu0 0.0
    %92 = vmatprep.subr.mxu0 0.0
    %93 = vmatpush1.msra.mxu0 0.0
    %94 = vmatprep.subr.mxu0 0.0
    %95 = vmatpush1.msra.mxu0 0.0
    %96 = vmatprep.subr.mxu0 0.0
    %97 = vmatpush1.msra.mxu0 0.0
    %98 = vmatprep.subr.mxu0 0.0
    %99 = vmatpush1.msra.mxu0 0.0
    %100 = vmatprep.subr.mxu0 0.0
    %101 = vmatpush1.msra.mxu0 0.0
    %102 = vmatprep.subr.mxu0 0.0
    %103 = vmatpush1.msra.mxu0 0.0
    %104 = vmatprep.subr.mxu0 0.0
    %105 = vmatpush1.msra.mxu0 0.0
    %106 = vmatprep.subr.mxu0 0.0
    %107 = vmatpush1.msra.mxu0 0.0
    %108 = vmatprep.subr.mxu0 0.0
    %109 = vmatpush1.msra.mxu0 0.0
    %110 = vmatprep.subr.mxu0 0.0
    %111 = vmatpush1.msra.mxu0 0.0
    %112 = vmatprep.subr.mxu0 0.0
    %113 = vmatpush1.msra.mxu0 0.0
    %114 = vmatprep.subr.mxu0 0.0
    %115 = vmatpush1.msra.mxu0 0.0
    %116 = vmatprep.subr.mxu0 0.0
    %117 = vmatpush1.msra.mxu0 0.0
    %118 = vmatprep.subr.mxu0 0.0
    %119 = vmatpush1.msra.mxu0 0.0
    %120 = vmatprep.subr.mxu0 0.0
    %121 = vmatpush1.msra.mxu0 0.0
    %122 = vmatprep.subr.mxu0 0.0
    %123 = vmatpush1.msra.mxu0 0.0
    %124 = vmatprep.subr.mxu0 0.0
    %125 = vmatpush1.msra.mxu0 0.0
    %126 = vmatprep.subr.mxu0 0.0
    %127 = vmatpush1.msra.mxu0 0.0
    %128 = vmatprep.subr.mxu0 0.0
    %129 = vmatpush1.msra.mxu0 0.0
    %130 = vmatprep.subr.mxu0 0.0
    %131 = vmatpush1.msra.mxu0 0.0
    %132 = vmatprep.subr.mxu0 0.0
    %133 = vmatpush1.msra.mxu0 0.0
    %134 = vmatprep.subr.mxu0 0.0
    %135 = vmatpush1.msra.mxu0 0.0
    %136 = vmatprep.subr.mxu0 0.0
    %137 = vmatpush1.msra.mxu0 0.0
    %138 = vmatprep.subr.mxu0 0.0
    %139 = vmatpush1.msra.mxu0 0.0
    %140 = vmatprep.mubr.f32.mxu0 0.0
    %141 = vmatmul.mubr.f32.gmra.mrb[0].mxu0 %v74
    %v142 = vpop.f32.mrb[0].mxu0
    %v143 = vadd.f32 %v70, %v142
    %v144 = vpop.f32.mrb[0].mxu0
    %145 = vdwg.mxu0
    %v146 = vxor.u32 %v143, 2147483648
    %v147 = vmul.f32 %v146, 1.442695
    %v148 = vpow.pop %v147
    %v149 = vadd.f32 %v148, 1.0
    %v150 = vrcp.pop %v149
    %v151 = vmul.f32 1.0, %v150
    %v152 = vmul.f32 %v65, %v151
    %153 = vrot.lane.b32.xlu0 %v70, 112
    %v154 = vpop.permute.xlu0 %153
    %v157 = vsel %vm72, %v152, 0
    %159 = vmatprep.subr.mxu0 0.0
    %160 = vmatpush1.msra.mxu0 %v55
    %161 = vmatprep.subr.mxu0 0.0
    %162 = vmatpush1.msra.mxu0 %v56
    %163 = vmatprep.subr.mxu0 0.0
    %164 = vmatpush1.msra.mxu0 0.0
    %165 = vmatprep.subr.mxu0 0.0
    %166 = vmatpush1.msra.mxu0 0.0
    %167 = vmatprep.subr.mxu0 0.0
    %168 = vmatpush1.msra.mxu0 0.0
    %169 = vmatprep.subr.mxu0 0.0
    %170 = vmatpush1.msra.mxu0 0.0
    %171 = vmatprep.subr.mxu0 0.0
    %172 = vmatpush1.msra.mxu0 0.0
    %173 = vmatprep.subr.mxu0 0.0
    %174 = vmatpush1.msra.mxu0 0.0
    %175 = vmatprep.subr.mxu0 0.0
    %176 = vmatpush1.msra.mxu0 0.0
    %177 = vmatprep.subr.mxu0 0.0
    %178 = vmatpush1.msra.mxu0 0.0
    %179 = vmatprep.subr.mxu0 0.0
    %180 = vmatpush1.msra.mxu0 0.0
    %181 = vmatprep.subr.mxu0 0.0
    %182 = vmatpush1.msra.mxu0 0.0
    %183 = vmatprep.subr.mxu0 0.0
    %184 = vmatpush1.msra.mxu0 0.0
    %185 = vmatprep.subr.mxu0 0.0
    %186 = vmatpush1.msra.mxu0 0.0
    %187 = vmatprep.subr.mxu0 0.0
    %188 = vmatpush1.msra.mxu0 0.0
    %189 = vmatprep.subr.mxu0 0.0
    %190 = vmatpush1.msra.mxu0 0.0
    %191 = vmatprep.subr.mxu0 0.0
    %192 = vmatpush1.msra.mxu0 0.0
    %193 = vmatprep.subr.mxu0 0.0
    %194 = vmatpush1.msra.mxu0 0.0
    %195 = vmatprep.subr.mxu0 0.0
    %196 = vmatpush1.msra.mxu0 0.0
    %197 = vmatprep.subr.mxu0 0.0
    %198 = vmatpush1.msra.mxu0 0.0
    %199 = vmatprep.subr.mxu0 0.0
    %200 = vmatpush1.msra.mxu0 0.0
    %201 = vmatprep.subr.mxu0 0.0
    %202 = vmatpush1.msra.mxu0 0.0
    %203 = vmatprep.subr.mxu0 0.0
    %204 = vmatpush1.msra.mxu0 0.0
    %205 = vmatprep.subr.mxu0 0.0
    %206 = vmatpush1.msra.mxu0 0.0
    %207 = vmatprep.subr.mxu0 0.0
    %208 = vmatpush1.msra.mxu0 0.0
    %209 = vmatprep.subr.mxu0 0.0
    %210 = vmatpush1.msra.mxu0 0.0
    %211 = vmatprep.subr.mxu0 0.0
    %212 = vmatpush1.msra.mxu0 0.0
    %213 = vmatprep.subr.mxu0 0.0
    %214 = vmatpush1.msra.mxu0 0.0
    %215 = vmatprep.subr.mxu0 0.0
    %216 = vmatpush1.msra.mxu0 0.0
    %217 = vmatprep.subr.mxu0 0.0
    %218 = vmatpush1.msra.mxu0 0.0
    %219 = vmatprep.subr.mxu0 0.0
    %220 = vmatpush1.msra.mxu0 0.0
    %221 = vmatprep.subr.mxu0 0.0
    %222 = vmatpush1.msra.mxu0 0.0
    %223 = vmatprep.mubr.f32.mxu0 0.0
    %224 = vmatmul.mubr.f32.gmra.mrb[0].mxu0 %v157
    %v225 = vpop.f32.mrb[0].mxu0
    %v226 = vadd.f32 %v154, %v225
    %v227 = vpop.f32.mrb[0].mxu0
    %228 = vdwg.mxu0
    %v229 = vmax.f32 %v226, 0.0
    %v230 = vld [vmem:[%s4] sm:$0xff]
    %v231 = vld [vmem:[%s4 + $0x8] sm:$0xff]
    %v232 = vld [vmem:[%s4 + $0x10] sm:$0xff]
    %v233 = vld [vmem:[%s4 + $0x18] sm:$0xff]
    %vm234 = vcmask 261120
    %v236 = vsel %vm234, %v229, 0
    %238 = vmatprep.subr.mxu0 0.0
    %239 = vmatpush1.msra.mxu0 %v230
    %240 = vmatprep.subr.mxu0 0.0
    %241 = vmatpush1.msra.mxu0 %v231
    %242 = vmatprep.subr.mxu0 0.0
    %243 = vmatpush1.msra.mxu0 %v232
    %244 = vmatprep.subr.mxu0 0.0
    %245 = vmatpush1.msra.mxu0 %v233
    %246 = vmatprep.subr.mxu0 0.0
    %247 = vmatpush1.msra.mxu0 0.0
    %248 = vmatprep.subr.mxu0 0.0
    %249 = vmatpush1.msra.mxu0 0.0
    %250 = vmatprep.subr.mxu0 0.0
    %251 = vmatpush1.msra.mxu0 0.0
    %252 = vmatprep.subr.mxu0 0.0
    %253 = vmatpush1.msra.mxu0 0.0
    %254 = vmatprep.subr.mxu0 0.0
    %255 = vmatpush1.msra.mxu0 0.0
    %256 = vmatprep.subr.mxu0 0.0
    %257 = vmatpush1.msra.mxu0 0.0
    %258 = vmatprep.subr.mxu0 0.0
    %259 = vmatpush1.msra.mxu0 0.0
    %260 = vmatprep.subr.mxu0 0.0
    %261 = vmatpush1.msra.mxu0 0.0
    %262 = vmatprep.subr.mxu0 0.0
    %263 = vmatpush1.msra.mxu0 0.0
    %264 = vmatprep.subr.mxu0 0.0
    %265 = vmatpush1.msra.mxu0 0.0
    %266 = vmatprep.subr.mxu0 0.0
    %267 = vmatpush1.msra.mxu0 0.0
    %268 = vmatprep.subr.mxu0 0.0
    %269 = vmatpush1.msra.mxu0 0.0
    %270 = vmatprep.subr.mxu0 0.0
    %271 = vmatpush1.msra.mxu0 0.0
    %272 = vmatprep.subr.mxu0 0.0
    %273 = vmatpush1.msra.mxu0 0.0
    %274 = vmatprep.subr.mxu0 0.0
    %275 = vmatpush1.msra.mxu0 0.0
    %276 = vmatprep.subr.mxu0 0.0
    %277 = vmatpush1.msra.mxu0 0.0
    %278 = vmatprep.subr.mxu0 0.0
    %279 = vmatpush1.msra.mxu0 0.0
    %280 = vmatprep.subr.mxu0 0.0
    %281 = vmatpush1.msra.mxu0 0.0
    %282 = vmatprep.subr.mxu0 0.0
    %283 = vmatpush1.msra.mxu0 0.0
    %284 = vmatprep.subr.mxu0 0.0
    %285 = vmatpush1.msra.mxu0 0.0
    %286 = vmatprep.subr.mxu0 0.0
    %287 = vmatpush1.msra.mxu0 0.0
    %288 = vmatprep.subr.mxu0 0.0
    %289 = vmatpush1.msra.mxu0 0.0
    %290 = vmatprep.subr.mxu0 0.0
    %291 = vmatpush1.msra.mxu0 0.0
    %292 = vmatprep.subr.mxu0 0.0
    %293 = vmatpush1.msra.mxu0 0.0
    %294 = vmatprep.subr.mxu0 0.0
    %295 = vmatpush1.msra.mxu0 0.0
    %296 = vmatprep.subr.mxu0 0.0
    %297 = vmatpush1.msra.mxu0 0.0
    %298 = vmatprep.subr.mxu0 0.0
    %299 = vmatpush1.msra.mxu0 0.0
    %300 = vmatprep.subr.mxu0 0.0
    %301 = vmatpush1.msra.mxu0 0.0
    %302 = vmatprep.mubr.f32.mxu0 0.0
    %303 = vmatmul.mubr.f32.gmra.mrb[0].mxu0 %v236
    %v304 = vpop.f32.mrb[0].mxu0
    %v305 = vadd.f32 0.0, %v304
    %v306 = vpop.f32.mrb[0].mxu0
    %307 = vdwg.mxu0
    %v308 = vadd.f32 %v63, %v305
    %s309 = scalar_lea.vmem %s0, 2
    %v310 = vld [vmem:[%s309] sm:$0x3]
    %v312 = vsel %vm72, %v310, 0
    %314 = vmatprep.subr.mxu0 0.0
    %315 = vmatpush1.msra.mxu0 %v53
    %316 = vmatprep.subr.mxu0 0.0
    %317 = vmatpush1.msra.mxu0 %v54
    %318 = vmatprep.subr.mxu0 0.0
    %319 = vmatpush1.msra.mxu0 0.0
    %320 = vmatprep.subr.mxu0 0.0
    %321 = vmatpush1.msra.mxu0 0.0
    %322 = vmatprep.subr.mxu0 0.0
    %323 = vmatpush1.msra.mxu0 0.0
    %324 = vmatprep.subr.mxu0 0.0
    %325 = vmatpush1.msra.mxu0 0.0
    %326 = vmatprep.subr.mxu0 0.0
    %327 = vmatpush1.msra.mxu0 0.0
    %328 = vmatprep.subr.mxu0 0.0
    %329 = vmatpush1.msra.mxu0 0.0
    %330 = vmatprep.subr.mxu0 0.0
    %331 = vmatpush1.msra.mxu0 0.0
    %332 = vmatprep.subr.mxu0 0.0
    %333 = vmatpush1.msra.mxu0 0.0
    %334 = vmatprep.subr.mxu0 0.0
    %335 = vmatpush1.msra.mxu0 0.0
    %336 = vmatprep.subr.mxu0 0.0
    %337 = vmatpush1.msra.mxu0 0.0
    %338 = vmatprep.subr.mxu0 0.0
    %339 = vmatpush1.msra.mxu0 0.0
    %340 = vmatprep.subr.mxu0 0.0
    %341 = vmatpush1.msra.mxu0 0.0
    %342 = vmatprep.subr.mxu0 0.0
    %343 = vmatpush1.msra.mxu0 0.0
    %344 = vmatprep.subr.mxu0 0.0
    %345 = vmatpush1.msra.mxu0 0.0
    %346 = vmatprep.subr.mxu0 0.0
    %347 = vmatpush1.msra.mxu0 0.0
    %348 = vmatprep.subr.mxu0 0.0
    %349 = vmatpush1.msra.mxu0 0.0
    %350 = vmatprep.subr.mxu0 0.0
    %351 = vmatpush1.msra.mxu0 0.0
    %352 = vmatprep.subr.mxu0 0.0
    %353 = vmatpush1.msra.mxu0 0.0
    %354 = vmatprep.subr.mxu0 0.0
    %355 = vmatpush1.msra.mxu0 0.0
    %356 = vmatprep.subr.mxu0 0.0
    %357 = vmatpush1.msra.mxu0 0.0
    %358 = vmatprep.subr.mxu0 0.0
    %359 = vmatpush1.msra.mxu0 0.0
    %360 = vmatprep.subr.mxu0 0.0
    %361 = vmatpush1.msra.mxu0 0.0
    %362 = vmatprep.subr.mxu0 0.0
    %363 = vmatpush1.msra.mxu0 0.0
    %364 = vmatprep.subr.mxu0 0.0
    %365 = vmatpush1.msra.mxu0 0.0
    %366 = vmatprep.subr.mxu0 0.0
    %367 = vmatpush1.msra.mxu0 0.0
    %368 = vmatprep.subr.mxu0 0.0
    %369 = vmatpush1.msra.mxu0 0.0
    %370 = vmatprep.subr.mxu0 0.0
    %371 = vmatpush1.msra.mxu0 0.0
    %372 = vmatprep.subr.mxu0 0.0
    %373 = vmatpush1.msra.mxu0 0.0
    %374 = vmatprep.subr.mxu0 0.0
    %375 = vmatpush1.msra.mxu0 0.0
    %376 = vmatprep.subr.mxu0 0.0
    %377 = vmatpush1.msra.mxu0 0.0
    %378 = vmatprep.mubr.f32.mxu0 0.0
    %379 = vmatmul.mubr.f32.gmra.mrb[0].mxu0 %v312
    %v380 = vpop.f32.mrb[0].mxu0
    %v381 = vadd.f32 %v70, %v380
    %v382 = vpop.f32.mrb[0].mxu0
    %383 = vdwg.mxu0
    %v384 = vxor.u32 %v381, 2147483648
    %v385 = vmul.f32 %v384, 1.442695
    %v386 = vpow.pop %v385
    %v387 = vadd.f32 %v386, 1.0
    %v388 = vrcp.pop %v387
    %v389 = vmul.f32 1.0, %v388
    %v390 = vmul.f32 %v310, %v389
    %v392 = vsel %vm72, %v390, 0
    %394 = vmatprep.subr.mxu0 0.0
    %395 = vmatpush1.msra.mxu0 %v55
    %396 = vmatprep.subr.mxu0 0.0
    %397 = vmatpush1.msra.mxu0 %v56
    %398 = vmatprep.subr.mxu0 0.0
    %399 = vmatpush1.msra.mxu0 0.0
    %400 = vmatprep.subr.mxu0 0.0
    %401 = vmatpush1.msra.mxu0 0.0
    %402 = vmatprep.subr.mxu0 0.0
    %403 = vmatpush1.msra.mxu0 0.0
    %404 = vmatprep.subr.mxu0 0.0
    %405 = vmatpush1.msra.mxu0 0.0
    %406 = vmatprep.subr.mxu0 0.0
    %407 = vmatpush1.msra.mxu0 0.0
    %408 = vmatprep.subr.mxu0 0.0
    %409 = vmatpush1.msra.mxu0 0.0
    %410 = vmatprep.subr.mxu0 0.0
    %411 = vmatpush1.msra.mxu0 0.0
    %412 = vmatprep.subr.mxu0 0.0
    %413 = vmatpush1.msra.mxu0 0.0
    %414 = vmatprep.subr.mxu0 0.0
    %415 = vmatpush1.msra.mxu0 0.0
    %416 = vmatprep.subr.mxu0 0.0
    %417 = vmatpush1.msra.mxu0 0.0
    %418 = vmatprep.subr.mxu0 0.0
    %419 = vmatpush1.msra.mxu0 0.0
    %420 = vmatprep.subr.mxu0 0.0
    %421 = vmatpush1.msra.mxu0 0.0
    %422 = vmatprep.subr.mxu0 0.0
    %423 = vmatpush1.msra.mxu0 0.0
    %424 = vmatprep.subr.mxu0 0.0
    %425 = vmatpush1.msra.mxu0 0.0
    %426 = vmatprep.subr.mxu0 0.0
    %427 = vmatpush1.msra.mxu0 0.0
    %428 = vmatprep.subr.mxu0 0.0
    %429 = vmatpush1.msra.mxu0 0.0
    %430 = vmatprep.subr.mxu0 0.0
    %431 = vmatpush1.msra.mxu0 0.0
    %432 = vmatprep.subr.mxu0 0.0
    %433 = vmatpush1.msra.mxu0 0.0
    %434 = vmatprep.subr.mxu0 0.0
    %435 = vmatpush1.msra.mxu0 0.0
    %436 = vmatprep.subr.mxu0 0.0
    %437 = vmatpush1.msra.mxu0 0.0
    %438 = vmatprep.subr.mxu0 0.0
    %439 = vmatpush1.msra.mxu0 0.0
    %440 = vmatprep.subr.mxu0 0.0
    %441 = vmatpush1.msra.mxu0 0.0
    %442 = vmatprep.subr.mxu0 0.0
    %443 = vmatpush1.msra.mxu0 0.0
    %444 = vmatprep.subr.mxu0 0.0
    %445 = vmatpush1.msra.mxu0 0.0
    %446 = vmatprep.subr.mxu0 0.0
    %447 = vmatpush1.msra.mxu0 0.0
    %448 = vmatprep.subr.mxu0 0.0
    %449 = vmatpush1.msra.mxu0 0.0
    %450 = vmatprep.subr.mxu0 0.0
    %451 = vmatpush1.msra.mxu0 0.0
    %452 = vmatprep.subr.mxu0 0.0
    %453 = vmatpush1.msra.mxu0 0.0
    %454 = vmatprep.subr.mxu0 0.0
    %455 = vmatpush1.msra.mxu0 0.0
    %456 = vmatprep.subr.mxu0 0.0
    %457 = vmatpush1.msra.mxu0 0.0
    %458 = vmatprep.mubr.f32.mxu0 0.0
    %459 = vmatmul.mubr.f32.gmra.mrb[0].mxu0 %v392
    %v460 = vpop.f32.mrb[0].mxu0
    %v461 = vadd.f32 %v154, %v460
    %v462 = vpop.f32.mrb[0].mxu0
    %463 = vdwg.mxu0
    %v464 = vmax.f32 %v461, 0.0
    %s465 = scalar_lea.vmem %s4, 32
    %v466 = vld [vmem:[%s465] sm:$0xff]
    %v467 = vld [vmem:[%s465 + $0x8] sm:$0xff]
    %v468 = vld [vmem:[%s465 + $0x10] sm:$0xff]
    %v469 = vld [vmem:[%s465 + $0x18] sm:$0xff]
    %v471 = vsel %vm234, %v464, 0
    %473 = vmatprep.subr.mxu0 0.0
    %474 = vmatpush1.msra.mxu0 %v466
    %475 = vmatprep.subr.mxu0 0.0
    %476 = vmatpush1.msra.mxu0 %v467
    %477 = vmatprep.subr.mxu0 0.0
    %478 = vmatpush1.msra.mxu0 %v468
    %479 = vmatprep.subr.mxu0 0.0
    %480 = vmatpush1.msra.mxu0 %v469
    %481 = vmatprep.subr.mxu0 0.0
    %482 = vmatpush1.msra.mxu0 0.0
    %483 = vmatprep.subr.mxu0 0.0
    %484 = vmatpush1.msra.mxu0 0.0
    %485 = vmatprep.subr.mxu0 0.0
    %486 = vmatpush1.msra.mxu0 0.0
    %487 = vmatprep.subr.mxu0 0.0
    %488 = vmatpush1.msra.mxu0 0.0
    %489 = vmatprep.subr.mxu0 0.0
    %490 = vmatpush1.msra.mxu0 0.0
    %491 = vmatprep.subr.mxu0 0.0
    %492 = vmatpush1.msra.mxu0 0.0
    %493 = vmatprep.subr.mxu0 0.0
    %494 = vmatpush1.msra.mxu0 0.0
    %495 = vmatprep.subr.mxu0 0.0
    %496 = vmatpush1.msra.mxu0 0.0
    %497 = vmatprep.subr.mxu0 0.0
    %498 = vmatpush1.msra.mxu0 0.0
    %499 = vmatprep.subr.mxu0 0.0
    %500 = vmatpush1.msra.mxu0 0.0
    %501 = vmatprep.subr.mxu0 0.0
    %502 = vmatpush1.msra.mxu0 0.0
    %503 = vmatprep.subr.mxu0 0.0
    %504 = vmatpush1.msra.mxu0 0.0
    %505 = vmatprep.subr.mxu0 0.0
    %506 = vmatpush1.msra.mxu0 0.0
    %507 = vmatprep.subr.mxu0 0.0
    %508 = vmatpush1.msra.mxu0 0.0
    %509 = vmatprep.subr.mxu0 0.0
    %510 = vmatpush1.msra.mxu0 0.0
    %511 = vmatprep.subr.mxu0 0.0
    %512 = vmatpush1.msra.mxu0 0.0
    %513 = vmatprep.subr.mxu0 0.0
    %514 = vmatpush1.msra.mxu0 0.0
    %515 = vmatprep.subr.mxu0 0.0
    %516 = vmatpush1.msra.mxu0 0.0
    %517 = vmatprep.subr.mxu0 0.0
    %518 = vmatpush1.msra.mxu0 0.0
    %519 = vmatprep.subr.mxu0 0.0
    %520 = vmatpush1.msra.mxu0 0.0
    %521 = vmatprep.subr.mxu0 0.0
    %522 = vmatpush1.msra.mxu0 0.0
    %523 = vmatprep.subr.mxu0 0.0
    %524 = vmatpush1.msra.mxu0 0.0
    %525 = vmatprep.subr.mxu0 0.0
    %526 = vmatpush1.msra.mxu0 0.0
    %527 = vmatprep.subr.mxu0 0.0
    %528 = vmatpush1.msra.mxu0 0.0
    %529 = vmatprep.subr.mxu0 0.0
    %530 = vmatpush1.msra.mxu0 0.0
    %531 = vmatprep.subr.mxu0 0.0
    %532 = vmatpush1.msra.mxu0 0.0
    %533 = vmatprep.subr.mxu0 0.0
    %534 = vmatpush1.msra.mxu0 0.0
    %535 = vmatprep.subr.mxu0 0.0
    %536 = vmatpush1.msra.mxu0 0.0
    %537 = vmatprep.mubr.f32.mxu0 0.0
    %538 = vmatmul.mubr.f32.gmra.mrb[0].mxu0 %v471
    %v539 = vpop.f32.mrb[0].mxu0
    %v540 = vadd.f32 0.0, %v539
    %v541 = vpop.f32.mrb[0].mxu0
    %542 = vdwg.mxu0
    %v543 = vadd.f32 %v308, %v540
    %s544 = scalar_lea.vmem %s0, 4
    %v545 = vld [vmem:[%s544] sm:$0x3]
    %v547 = vsel %vm72, %v545, 0
    %549 = vmatprep.subr.mxu0 0.0
    %550 = vmatpush1.msra.mxu0 %v53
    %551 = vmatprep.subr.mxu0 0.0
    %552 = vmatpush1.msra.mxu0 %v54
    %553 = vmatprep.subr.mxu0 0.0
    %554 = vmatpush1.msra.mxu0 0.0
    %555 = vmatprep.subr.mxu0 0.0
    %556 = vmatpush1.msra.mxu0 0.0
    %557 = vmatprep.subr.mxu0 0.0
    %558 = vmatpush1.msra.mxu0 0.0
    %559 = vmatprep.subr.mxu0 0.0
    %560 = vmatpush1.msra.mxu0 0.0
    %561 = vmatprep.subr.mxu0 0.0
    %562 = vmatpush1.msra.mxu0 0.0
    %563 = vmatprep.subr.mxu0 0.0
    %564 = vmatpush1.msra.mxu0 0.0
    %565 = vmatprep.subr.mxu0 0.0
    %566 = vmatpush1.msra.mxu0 0.0
    %567 = vmatprep.subr.mxu0 0.0
    %568 = vmatpush1.msra.mxu0 0.0
    %569 = vmatprep.subr.mxu0 0.0
    %570 = vmatpush1.msra.mxu0 0.0
    %571 = vmatprep.subr.mxu0 0.0
    %572 = vmatpush1.msra.mxu0 0.0
    %573 = vmatprep.subr.mxu0 0.0
    %574 = vmatpush1.msra.mxu0 0.0
    %575 = vmatprep.subr.mxu0 0.0
    %576 = vmatpush1.msra.mxu0 0.0
    %577 = vmatprep.subr.mxu0 0.0
    %578 = vmatpush1.msra.mxu0 0.0
    %579 = vmatprep.subr.mxu0 0.0
    %580 = vmatpush1.msra.mxu0 0.0
    %581 = vmatprep.subr.mxu0 0.0
    %582 = vmatpush1.msra.mxu0 0.0
    %583 = vmatprep.subr.mxu0 0.0
    %584 = vmatpush1.msra.mxu0 0.0
    %585 = vmatprep.subr.mxu0 0.0
    %586 = vmatpush1.msra.mxu0 0.0
    %587 = vmatprep.subr.mxu0 0.0
    %588 = vmatpush1.msra.mxu0 0.0
    %589 = vmatprep.subr.mxu0 0.0
    %590 = vmatpush1.msra.mxu0 0.0
    %591 = vmatprep.subr.mxu0 0.0
    %592 = vmatpush1.msra.mxu0 0.0
    %593 = vmatprep.subr.mxu0 0.0
    %594 = vmatpush1.msra.mxu0 0.0
    %595 = vmatprep.subr.mxu0 0.0
    %596 = vmatpush1.msra.mxu0 0.0
    %597 = vmatprep.subr.mxu0 0.0
    %598 = vmatpush1.msra.mxu0 0.0
    %599 = vmatprep.subr.mxu0 0.0
    %600 = vmatpush1.msra.mxu0 0.0
    %601 = vmatprep.subr.mxu0 0.0
    %602 = vmatpush1.msra.mxu0 0.0
    %603 = vmatprep.subr.mxu0 0.0
    %604 = vmatpush1.msra.mxu0 0.0
    %605 = vmatprep.subr.mxu0 0.0
    %606 = vmatpush1.msra.mxu0 0.0
    %607 = vmatprep.subr.mxu0 0.0
    %608 = vmatpush1.msra.mxu0 0.0
    %609 = vmatprep.subr.mxu0 0.0
    %610 = vmatpush1.msra.mxu0 0.0
    %611 = vmatprep.subr.mxu0 0.0
    %612 = vmatpush1.msra.mxu0 0.0
    %613 = vmatprep.mubr.f32.mxu0 0.0
    %614 = vmatmul.mubr.f32.gmra.mrb[0].mxu0 %v547
    %v615 = vpop.f32.mrb[0].mxu0
    %v616 = vadd.f32 %v70, %v615
    %v617 = vpop.f32.mrb[0].mxu0
    %618 = vdwg.mxu0
    %v619 = vxor.u32 %v616, 2147483648
    %v620 = vmul.f32 %v619, 1.442695
    %v621 = vpow.pop %v620
    %v622 = vadd.f32 %v621, 1.0
    %v623 = vrcp.pop %v622
    %v624 = vmul.f32 1.0, %v623
    %v625 = vmul.f32 %v545, %v624
    %v627 = vsel %vm72, %v625, 0
    %629 = vmatprep.subr.mxu0 0.0
    %630 = vmatpush1.msra.mxu0 %v55
    %631 = vmatprep.subr.mxu0 0.0
    %632 = vmatpush1.msra.mxu0 %v56
    %633 = vmatprep.subr.mxu0 0.0
    %634 = vmatpush1.msra.mxu0 0.0
    %635 = vmatprep.subr.mxu0 0.0
    %636 = vmatpush1.msra.mxu0 0.0
    %637 = vmatprep.subr.mxu0 0.0
    %638 = vmatpush1.msra.mxu0 0.0
    %639 = vmatprep.subr.mxu0 0.0
    %640 = vmatpush1.msra.mxu0 0.0
    %641 = vmatprep.subr.mxu0 0.0
    %642 = vmatpush1.msra.mxu0 0.0
    %643 = vmatprep.subr.mxu0 0.0
    %644 = vmatpush1.msra.mxu0 0.0
    %645 = vmatprep.subr.mxu0 0.0
    %646 = vmatpush1.msra.mxu0 0.0
    %647 = vmatprep.subr.mxu0 0.0
    %648 = vmatpush1.msra.mxu0 0.0
    %649 = vmatprep.subr.mxu0 0.0
    %650 = vmatpush1.msra.mxu0 0.0
    %651 = vmatprep.subr.mxu0 0.0
    %652 = vmatpush1.msra.mxu0 0.0
    %653 = vmatprep.subr.mxu0 0.0
    %654 = vmatpush1.msra.mxu0 0.0
    %655 = vmatprep.subr.mxu0 0.0
    %656 = vmatpush1.msra.mxu0 0.0
    %657 = vmatprep.subr.mxu0 0.0
    %658 = vmatpush1.msra.mxu0 0.0
    %659 = vmatprep.subr.mxu0 0.0
    %660 = vmatpush1.msra.mxu0 0.0
    %661 = vmatprep.subr.mxu0 0.0
    %662 = vmatpush1.msra.mxu0 0.0
    %663 = vmatprep.subr.mxu0 0.0
    %664 = vmatpush1.msra.mxu0 0.0
    %665 = vmatprep.subr.mxu0 0.0
    %666 = vmatpush1.msra.mxu0 0.0
    %667 = vmatprep.subr.mxu0 0.0
    %668 = vmatpush1.msra.mxu0 0.0
    %669 = vmatprep.subr.mxu0 0.0
    %670 = vmatpush1.msra.mxu0 0.0
    %671 = vmatprep.subr.mxu0 0.0
    %672 = vmatpush1.msra.mxu0 0.0
    %673 = vmatprep.subr.mxu0 0.0
    %674 = vmatpush1.msra.mxu0 0.0
    %675 = vmatprep.subr.mxu0 0.0
    %676 = vmatpush1.msra.mxu0 0.0
    %677 = vmatprep.subr.mxu0 0.0
    %678 = vmatpush1.msra.mxu0 0.0
    %679 = vmatprep.subr.mxu0 0.0
    %680 = vmatpush1.msra.mxu0 0.0
    %681 = vmatprep.subr.mxu0 0.0
    %682 = vmatpush1.msra.mxu0 0.0
    %683 = vmatprep.subr.mxu0 0.0
    %684 = vmatpush1.msra.mxu0 0.0
    %685 = vmatprep.subr.mxu0 0.0
    %686 = vmatpush1.msra.mxu0 0.0
    %687 = vmatprep.subr.mxu0 0.0
    %688 = vmatpush1.msra.mxu0 0.0
    %689 = vmatprep.subr.mxu0 0.0
    %690 = vmatpush1.msra.mxu0 0.0
    %691 = vmatprep.subr.mxu0 0.0
    %692 = vmatpush1.msra.mxu0 0.0
    %693 = vmatprep.mubr.f32.mxu0 0.0
    %694 = vmatmul.mubr.f32.gmra.mrb[0].mxu0 %v627
    %v695 = vpop.f32.mrb[0].mxu0
    %v696 = vadd.f32 %v154, %v695
    %v697 = vpop.f32.mrb[0].mxu0
    %698 = vdwg.mxu0
    %v699 = vmax.f32 %v696, 0.0
    %s700 = scalar_lea.vmem %s4, 64
    %v701 = vld [vmem:[%s700] sm:$0xff]
    %v702 = vld [vmem:[%s700 + $0x8] sm:$0xff]
    %v703 = vld [vmem:[%s700 + $0x10] sm:$0xff]
    %v704 = vld [vmem:[%s700 + $0x18] sm:$0xff]
    %v706 = vsel %vm234, %v699, 0
    %708 = vmatprep.subr.mxu0 0.0
    %709 = vmatpush1.msra.mxu0 %v701
    %710 = vmatprep.subr.mxu0 0.0
    %711 = vmatpush1.msra.mxu0 %v702
    %712 = vmatprep.subr.mxu0 0.0
    %713 = vmatpush1.msra.mxu0 %v703
    %714 = vmatprep.subr.mxu0 0.0
    %715 = vmatpush1.msra.mxu0 %v704
    %716 = vmatprep.subr.mxu0 0.0
    %717 = vmatpush1.msra.mxu0 0.0
    %718 = vmatprep.subr.mxu0 0.0
    %719 = vmatpush1.msra.mxu0 0.0
    %720 = vmatprep.subr.mxu0 0.0
    %721 = vmatpush1.msra.mxu0 0.0
    %722 = vmatprep.subr.mxu0 0.0
    %723 = vmatpush1.msra.mxu0 0.0
    %724 = vmatprep.subr.mxu0 0.0
    %725 = vmatpush1.msra.mxu0 0.0
    %726 = vmatprep.subr.mxu0 0.0
    %727 = vmatpush1.msra.mxu0 0.0
    %728 = vmatprep.subr.mxu0 0.0
    %729 = vmatpush1.msra.mxu0 0.0
    %730 = vmatprep.subr.mxu0 0.0
    %731 = vmatpush1.msra.mxu0 0.0
    %732 = vmatprep.subr.mxu0 0.0
    %733 = vmatpush1.msra.mxu0 0.0
    %734 = vmatprep.subr.mxu0 0.0
    %735 = vmatpush1.msra.mxu0 0.0
    %736 = vmatprep.subr.mxu0 0.0
    %737 = vmatpush1.msra.mxu0 0.0
    %738 = vmatprep.subr.mxu0 0.0
    %739 = vmatpush1.msra.mxu0 0.0
    %740 = vmatprep.subr.mxu0 0.0
    %741 = vmatpush1.msra.mxu0 0.0
    %742 = vmatprep.subr.mxu0 0.0
    %743 = vmatpush1.msra.mxu0 0.0
    %744 = vmatprep.subr.mxu0 0.0
    %745 = vmatpush1.msra.mxu0 0.0
    %746 = vmatprep.subr.mxu0 0.0
    %747 = vmatpush1.msra.mxu0 0.0
    %748 = vmatprep.subr.mxu0 0.0
    %749 = vmatpush1.msra.mxu0 0.0
    %750 = vmatprep.subr.mxu0 0.0
    %751 = vmatpush1.msra.mxu0 0.0
    %752 = vmatprep.subr.mxu0 0.0
    %753 = vmatpush1.msra.mxu0 0.0
    %754 = vmatprep.subr.mxu0 0.0
    %755 = vmatpush1.msra.mxu0 0.0
    %756 = vmatprep.subr.mxu0 0.0
    %757 = vmatpush1.msra.mxu0 0.0
    %758 = vmatprep.subr.mxu0 0.0
    %759 = vmatpush1.msra.mxu0 0.0
    %760 = vmatprep.subr.mxu0 0.0
    %761 = vmatpush1.msra.mxu0 0.0
    %762 = vmatprep.subr.mxu0 0.0
    %763 = vmatpush1.msra.mxu0 0.0
    %764 = vmatprep.subr.mxu0 0.0
    %765 = vmatpush1.msra.mxu0 0.0
    %766 = vmatprep.subr.mxu0 0.0
    %767 = vmatpush1.msra.mxu0 0.0
    %768 = vmatprep.subr.mxu0 0.0
    %769 = vmatpush1.msra.mxu0 0.0
    %770 = vmatprep.subr.mxu0 0.0
    %771 = vmatpush1.msra.mxu0 0.0
    %772 = vmatprep.mubr.f32.mxu0 0.0
    %773 = vmatmul.mubr.f32.gmra.mrb[0].mxu0 %v706
    %v774 = vpop.f32.mrb[0].mxu0
    %v775 = vadd.f32 0.0, %v774
    %v776 = vpop.f32.mrb[0].mxu0
    %777 = vdwg.mxu0
    %v778 = vadd.f32 %v543, %v775
    %s779 = scalar_lea.vmem %s0, 6
    %v780 = vld [vmem:[%s779] sm:$0x3]
    %v782 = vsel %vm72, %v780, 0
    %784 = vmatprep.subr.mxu0 0.0
    %785 = vmatpush1.msra.mxu0 %v53
    %786 = vmatprep.subr.mxu0 0.0
    %787 = vmatpush1.msra.mxu0 %v54
    %788 = vmatprep.subr.mxu0 0.0
    %789 = vmatpush1.msra.mxu0 0.0
    %790 = vmatprep.subr.mxu0 0.0
    %791 = vmatpush1.msra.mxu0 0.0
    %792 = vmatprep.subr.mxu0 0.0
    %793 = vmatpush1.msra.mxu0 0.0
    %794 = vmatprep.subr.mxu0 0.0
    %795 = vmatpush1.msra.mxu0 0.0
    %796 = vmatprep.subr.mxu0 0.0
    %797 = vmatpush1.msra.mxu0 0.0
    %798 = vmatprep.subr.mxu0 0.0
    %799 = vmatpush1.msra.mxu0 0.0
    %800 = vmatprep.subr.mxu0 0.0
    %801 = vmatpush1.msra.mxu0 0.0
    %802 = vmatprep.subr.mxu0 0.0
    %803 = vmatpush1.msra.mxu0 0.0
    %804 = vmatprep.subr.mxu0 0.0
    %805 = vmatpush1.msra.mxu0 0.0
    %806 = vmatprep.subr.mxu0 0.0
    %807 = vmatpush1.msra.mxu0 0.0
    %808 = vmatprep.subr.mxu0 0.0
    %809 = vmatpush1.msra.mxu0 0.0
    %810 = vmatprep.subr.mxu0 0.0
    %811 = vmatpush1.msra.mxu0 0.0
    %812 = vmatprep.subr.mxu0 0.0
    %813 = vmatpush1.msra.mxu0 0.0
    %814 = vmatprep.subr.mxu0 0.0
    %815 = vmatpush1.msra.mxu0 0.0
    %816 = vmatprep.subr.mxu0 0.0
    %817 = vmatpush1.msra.mxu0 0.0
    %818 = vmatprep.subr.mxu0 0.0
    %819 = vmatpush1.msra.mxu0 0.0
    %820 = vmatprep.subr.mxu0 0.0
    %821 = vmatpush1.msra.mxu0 0.0
    %822 = vmatprep.subr.mxu0 0.0
    %823 = vmatpush1.msra.mxu0 0.0
    %824 = vmatprep.subr.mxu0 0.0
    %825 = vmatpush1.msra.mxu0 0.0
    %826 = vmatprep.subr.mxu0 0.0
    %827 = vmatpush1.msra.mxu0 0.0
    %828 = vmatprep.subr.mxu0 0.0
    %829 = vmatpush1.msra.mxu0 0.0
    %830 = vmatprep.subr.mxu0 0.0
    %831 = vmatpush1.msra.mxu0 0.0
    %832 = vmatprep.subr.mxu0 0.0
    %833 = vmatpush1.msra.mxu0 0.0
    %834 = vmatprep.subr.mxu0 0.0
    %835 = vmatpush1.msra.mxu0 0.0
    %836 = vmatprep.subr.mxu0 0.0
    %837 = vmatpush1.msra.mxu0 0.0
    %838 = vmatprep.subr.mxu0 0.0
    %839 = vmatpush1.msra.mxu0 0.0
    %840 = vmatprep.subr.mxu0 0.0
    %841 = vmatpush1.msra.mxu0 0.0
    %842 = vmatprep.subr.mxu0 0.0
    %843 = vmatpush1.msra.mxu0 0.0
    %844 = vmatprep.subr.mxu0 0.0
    %845 = vmatpush1.msra.mxu0 0.0
    %846 = vmatprep.subr.mxu0 0.0
    %847 = vmatpush1.msra.mxu0 0.0
    %848 = vmatprep.mubr.f32.mxu0 0.0
    %849 = vmatmul.mubr.f32.gmra.mrb[0].mxu0 %v782
    %v850 = vpop.f32.mrb[0].mxu0
    %v851 = vadd.f32 %v70, %v850
    %v852 = vpop.f32.mrb[0].mxu0
    %853 = vdwg.mxu0
    %v854 = vxor.u32 %v851, 2147483648
    %v855 = vmul.f32 %v854, 1.442695
    %v856 = vpow.pop %v855
    %v857 = vadd.f32 %v856, 1.0
    %v858 = vrcp.pop %v857
    %v859 = vmul.f32 1.0, %v858
    %v860 = vmul.f32 %v780, %v859
    %v862 = vsel %vm72, %v860, 0
    %864 = vmatprep.subr.mxu0 0.0
    %865 = vmatpush1.msra.mxu0 %v55
    %866 = vmatprep.subr.mxu0 0.0
    %867 = vmatpush1.msra.mxu0 %v56
    %868 = vmatprep.subr.mxu0 0.0
    %869 = vmatpush1.msra.mxu0 0.0
    %870 = vmatprep.subr.mxu0 0.0
    %871 = vmatpush1.msra.mxu0 0.0
    %872 = vmatprep.subr.mxu0 0.0
    %873 = vmatpush1.msra.mxu0 0.0
    %874 = vmatprep.subr.mxu0 0.0
    %875 = vmatpush1.msra.mxu0 0.0
    %876 = vmatprep.subr.mxu0 0.0
    %877 = vmatpush1.msra.mxu0 0.0
    %878 = vmatprep.subr.mxu0 0.0
    %879 = vmatpush1.msra.mxu0 0.0
    %880 = vmatprep.subr.mxu0 0.0
    %881 = vmatpush1.msra.mxu0 0.0
    %882 = vmatprep.subr.mxu0 0.0
    %883 = vmatpush1.msra.mxu0 0.0
    %884 = vmatprep.subr.mxu0 0.0
    %885 = vmatpush1.msra.mxu0 0.0
    %886 = vmatprep.subr.mxu0 0.0
    %887 = vmatpush1.msra.mxu0 0.0
    %888 = vmatprep.subr.mxu0 0.0
    %889 = vmatpush1.msra.mxu0 0.0
    %890 = vmatprep.subr.mxu0 0.0
    %891 = vmatpush1.msra.mxu0 0.0
    %892 = vmatprep.subr.mxu0 0.0
    %893 = vmatpush1.msra.mxu0 0.0
    %894 = vmatprep.subr.mxu0 0.0
    %895 = vmatpush1.msra.mxu0 0.0
    %896 = vmatprep.subr.mxu0 0.0
    %897 = vmatpush1.msra.mxu0 0.0
    %898 = vmatprep.subr.mxu0 0.0
    %899 = vmatpush1.msra.mxu0 0.0
    %900 = vmatprep.subr.mxu0 0.0
    %901 = vmatpush1.msra.mxu0 0.0
    %902 = vmatprep.subr.mxu0 0.0
    %903 = vmatpush1.msra.mxu0 0.0
    %904 = vmatprep.subr.mxu0 0.0
    %905 = vmatpush1.msra.mxu0 0.0
    %906 = vmatprep.subr.mxu0 0.0
    %907 = vmatpush1.msra.mxu0 0.0
    %908 = vmatprep.subr.mxu0 0.0
    %909 = vmatpush1.msra.mxu0 0.0
    %910 = vmatprep.subr.mxu0 0.0
    %911 = vmatpush1.msra.mxu0 0.0
    %912 = vmatprep.subr.mxu0 0.0
    %913 = vmatpush1.msra.mxu0 0.0
    %914 = vmatprep.subr.mxu0 0.0
    %915 = vmatpush1.msra.mxu0 0.0
    %916 = vmatprep.subr.mxu0 0.0
    %917 = vmatpush1.msra.mxu0 0.0
    %918 = vmatprep.subr.mxu0 0.0
    %919 = vmatpush1.msra.mxu0 0.0
    %920 = vmatprep.subr.mxu0 0.0
    %921 = vmatpush1.msra.mxu0 0.0
    %922 = vmatprep.subr.mxu0 0.0
    %923 = vmatpush1.msra.mxu0 0.0
    %924 = vmatprep.subr.mxu0 0.0
    %925 = vmatpush1.msra.mxu0 0.0
    %926 = vmatprep.subr.mxu0 0.0
    %927 = vmatpush1.msra.mxu0 0.0
    %928 = vmatprep.mubr.f32.mxu0 0.0
    %929 = vmatmul.mubr.f32.gmra.mrb[0].mxu0 %v862
    %v930 = vpop.f32.mrb[0].mxu0
    %v931 = vadd.f32 %v154, %v930
    %v932 = vpop.f32.mrb[0].mxu0
    %933 = vdwg.mxu0
    %v934 = vmax.f32 %v931, 0.0
    %s935 = scalar_lea.vmem %s4, 96
    %v936 = vld [vmem:[%s935] sm:$0xff]
    %v937 = vld [vmem:[%s935 + $0x8] sm:$0xff]
    %v938 = vld [vmem:[%s935 + $0x10] sm:$0xff]
    %v939 = vld [vmem:[%s935 + $0x18] sm:$0xff]
    %v941 = vsel %vm234, %v934, 0
    %943 = vmatprep.subr.mxu0 0.0
    %944 = vmatpush1.msra.mxu0 %v936
    %945 = vmatprep.subr.mxu0 0.0
    %946 = vmatpush1.msra.mxu0 %v937
    %947 = vmatprep.subr.mxu0 0.0
    %948 = vmatpush1.msra.mxu0 %v938
    %949 = vmatprep.subr.mxu0 0.0
    %950 = vmatpush1.msra.mxu0 %v939
    %951 = vmatprep.subr.mxu0 0.0
    %952 = vmatpush1.msra.mxu0 0.0
    %953 = vmatprep.subr.mxu0 0.0
    %954 = vmatpush1.msra.mxu0 0.0
    %955 = vmatprep.subr.mxu0 0.0
    %956 = vmatpush1.msra.mxu0 0.0
    %957 = vmatprep.subr.mxu0 0.0
    %958 = vmatpush1.msra.mxu0 0.0
    %959 = vmatprep.subr.mxu0 0.0
    %960 = vmatpush1.msra.mxu0 0.0
    %961 = vmatprep.subr.mxu0 0.0
    %962 = vmatpush1.msra.mxu0 0.0
    %963 = vmatprep.subr.mxu0 0.0
    %964 = vmatpush1.msra.mxu0 0.0
    %965 = vmatprep.subr.mxu0 0.0
    %966 = vmatpush1.msra.mxu0 0.0
    %967 = vmatprep.subr.mxu0 0.0
    %968 = vmatpush1.msra.mxu0 0.0
    %969 = vmatprep.subr.mxu0 0.0
    %970 = vmatpush1.msra.mxu0 0.0
    %971 = vmatprep.subr.mxu0 0.0
    %972 = vmatpush1.msra.mxu0 0.0
    %973 = vmatprep.subr.mxu0 0.0
    %974 = vmatpush1.msra.mxu0 0.0
    %975 = vmatprep.subr.mxu0 0.0
    %976 = vmatpush1.msra.mxu0 0.0
    %977 = vmatprep.subr.mxu0 0.0
    %978 = vmatpush1.msra.mxu0 0.0
    %979 = vmatprep.subr.mxu0 0.0
    %980 = vmatpush1.msra.mxu0 0.0
    %981 = vmatprep.subr.mxu0 0.0
    %982 = vmatpush1.msra.mxu0 0.0
    %983 = vmatprep.subr.mxu0 0.0
    %984 = vmatpush1.msra.mxu0 0.0
    %985 = vmatprep.subr.mxu0 0.0
    %986 = vmatpush1.msra.mxu0 0.0
    %987 = vmatprep.subr.mxu0 0.0
    %988 = vmatpush1.msra.mxu0 0.0
    %989 = vmatprep.subr.mxu0 0.0
    %990 = vmatpush1.msra.mxu0 0.0
    %991 = vmatprep.subr.mxu0 0.0
    %992 = vmatpush1.msra.mxu0 0.0
    %993 = vmatprep.subr.mxu0 0.0
    %994 = vmatpush1.msra.mxu0 0.0
    %995 = vmatprep.subr.mxu0 0.0
    %996 = vmatpush1.msra.mxu0 0.0
    %997 = vmatprep.subr.mxu0 0.0
    %998 = vmatpush1.msra.mxu0 0.0
    %999 = vmatprep.subr.mxu0 0.0
    %1000 = vmatpush1.msra.mxu0 0.0
    %1001 = vmatprep.subr.mxu0 0.0
    %1002 = vmatpush1.msra.mxu0 0.0
    %1003 = vmatprep.subr.mxu0 0.0
    %1004 = vmatpush1.msra.mxu0 0.0
    %1005 = vmatprep.subr.mxu0 0.0
    %1006 = vmatpush1.msra.mxu0 0.0
    %1007 = vmatprep.mubr.f32.mxu0 0.0
    %1008 = vmatmul.mubr.f32.gmra.mrb[0].mxu0 %v941
    %v1009 = vpop.f32.mrb[0].mxu0
    %v1010 = vadd.f32 0.0, %v1009
    %v1011 = vpop.f32.mrb[0].mxu0
    %1012 = vdwg.mxu0
    %v1013 = vadd.f32 %v778, %v1010
    %1015 = vset.pattern.permute.xlu0 3
    %1016 = vperm.xlu0 %1015, %v1013
    %v1017 = vpop.permute.xlu0 %1016
    %v1019 = vmul.f32 %v1017, %v1013
    %1021 = vrot.lane.b32.xlu0 %v1019, 124
    %v1022 = vpop.permute.xlu0 %1021
    %v1024 = vadd.f32 %v51, %v1022
    %1025 = vrot.lane.b32.xlu0 %v1013, 3
    %v1026 = vpop.permute.xlu0 %1025
    %vm1028 = vcmask 42008
    %1029 = vst.msk [vmem:[#allocation2] sm:$0x3] %vm1028, %v1026
    %vm1030 = vcmask 50224
    %1031 = vst.msk [vmem:[#allocation2] sm:$0x3] %vm1030, %v1026
    %v1032 = vld [vmem:[%s7] sm:$0xff]
    %v1033 = vld [vmem:[%s7 + $0x8] sm:$0xff]
    %v1034 = vld [vmem:[%s8] sm:$0xff]
    %v1035 = vld [vmem:[%s8 + $0x8] sm:$0xff]
    %v1036 = vld [vmem:[%s9] sm:$0x1]
    %v1037 = vld [vmem:[%s11] sm:$0x1]
    %v1039 = vlaneseq
    %v1040 = vshrl.u32 %v1039, 7
    %v1041 = vsub.s32 0, %v1040
    %v1042 = vrot.slane %v1037, %v1041
    %v1044 = vld [vmem:[%s6] sm:$0x3]
    %v1046 = vlaneseq
    %v1047 = vshrl.u32 %v1046, 7
    %v1048 = vsub.s32 0, %v1047
    %v1049 = vrot.slane %v1036, %v1048
    %v1052 = vsel %vm72, %v1044, 0
    %1054 = vmatprep.subr.mxu0 0.0
    %1055 = vmatpush1.msra.mxu0 %v1032
    %1056 = vmatprep.subr.mxu0 0.0
    %1057 = vmatpush1.msra.mxu0 %v1033
    %1058 = vmatprep.subr.mxu0 0.0
    %1059 = vmatpush1.msra.mxu0 0.0
    %1060 = vmatprep.subr.mxu0 0.0
    %1061 = vmatpush1.msra.mxu0 0.0
    %1062 = vmatprep.subr.mxu0 0.0
    %1063 = vmatpush1.msra.mxu0 0.0
    %1064 = vmatprep.subr.mxu0 0.0
    %1065 = vmatpush1.msra.mxu0 0.0
    %1066 = vmatprep.subr.mxu0 0.0
    %1067 = vmatpush1.msra.mxu0 0.0
    %1068 = vmatprep.subr.mxu0 0.0
    %1069 = vmatpush1.msra.mxu0 0.0
    %1070 = vmatprep.subr.mxu0 0.0
    %1071 = vmatpush1.msra.mxu0 0.0
    %1072 = vmatprep.subr.mxu0 0.0
    %1073 = vmatpush1.msra.mxu0 0.0
    %1074 = vmatprep.subr.mxu0 0.0
    %1075 = vmatpush1.msra.mxu0 0.0
    %1076 = vmatprep.subr.mxu0 0.0
    %1077 = vmatpush1.msra.mxu0 0.0
    %1078 = vmatprep.subr.mxu0 0.0
    %1079 = vmatpush1.msra.mxu0 0.0
    %1080 = vmatprep.subr.mxu0 0.0
    %1081 = vmatpush1.msra.mxu0 0.0
    %1082 = vmatprep.subr.mxu0 0.0
    %1083 = vmatpush1.msra.mxu0 0.0
    %1084 = vmatprep.subr.mxu0 0.0
    %1085 = vmatpush1.msra.mxu0 0.0
    %1086 = vmatprep.subr.mxu0 0.0
    %1087 = vmatpush1.msra.mxu0 0.0
    %1088 = vmatprep.subr.mxu0 0.0
    %1089 = vmatpush1.msra.mxu0 0.0
    %1090 = vmatprep.subr.mxu0 0.0
    %1091 = vmatpush1.msra.mxu0 0.0
    %1092 = vmatprep.subr.mxu0 0.0
    %1093 = vmatpush1.msra.mxu0 0.0
    %1094 = vmatprep.subr.mxu0 0.0
    %1095 = vmatpush1.msra.mxu0 0.0
    %1096 = vmatprep.subr.mxu0 0.0
    %1097 = vmatpush1.msra.mxu0 0.0
    %1098 = vmatprep.subr.mxu0 0.0
    %1099 = vmatpush1.msra.mxu0 0.0
    %1100 = vmatprep.subr.mxu0 0.0
    %1101 = vmatpush1.msra.mxu0 0.0
    %1102 = vmatprep.subr.mxu0 0.0
    %1103 = vmatpush1.msra.mxu0 0.0
    %1104 = vmatprep.subr.mxu0 0.0
    %1105 = vmatpush1.msra.mxu0 0.0
    %1106 = vmatprep.subr.mxu0 0.0
    %1107 = vmatpush1.msra.mxu0 0.0
    %1108 = vmatprep.subr.mxu0 0.0
    %1109 = vmatpush1.msra.mxu0 0.0
    %1110 = vmatprep.subr.mxu0 0.0
    %1111 = vmatpush1.msra.mxu0 0.0
    %1112 = vmatprep.subr.mxu0 0.0
    %1113 = vmatpush1.msra.mxu0 0.0
    %1114 = vmatprep.subr.mxu0 0.0
    %1115 = vmatpush1.msra.mxu0 0.0
    %1116 = vmatprep.subr.mxu0 0.0
    %1117 = vmatpush1.msra.mxu0 0.0
    %1118 = vmatprep.mubr.f32.mxu0 0.0
    %1119 = vmatmul.mubr.f32.gmra.mrb[0].mxu0 %v1052
    %v1120 = vpop.f32.mrb[0].mxu0
    %v1121 = vadd.f32 %v1049, %v1120
    %v1122 = vpop.f32.mrb[0].mxu0
    %1123 = vdwg.mxu0
    %v1124 = vxor.u32 %v1121, 2147483648
    %v1125 = vmul.f32 %v1124, 1.442695
    %v1126 = vpow.pop %v1125
    %v1127 = vadd.f32 %v1126, 1.0
    %v1128 = vrcp.pop %v1127
    %v1129 = vmul.f32 1.0, %v1128
    %v1130 = vmul.f32 %v1044, %v1129
    %1131 = vrot.lane.b32.xlu0 %v1049, 112
    %v1132 = vpop.permute.xlu0 %1131
    %v1135 = vsel %vm72, %v1130, 0
    %1137 = vmatprep.subr.mxu0 0.0
    %1138 = vmatpush1.msra.mxu0 %v1034
    %1139 = vmatprep.subr.mxu0 0.0
    %1140 = vmatpush1.msra.mxu0 %v1035
    %1141 = vmatprep.subr.mxu0 0.0
    %1142 = vmatpush1.msra.mxu0 0.0
    %1143 = vmatprep.subr.mxu0 0.0
    %1144 = vmatpush1.msra.mxu0 0.0
    %1145 = vmatprep.subr.mxu0 0.0
    %1146 = vmatpush1.msra.mxu0 0.0
    %1147 = vmatprep.subr.mxu0 0.0
    %1148 = vmatpush1.msra.mxu0 0.0
    %1149 = vmatprep.subr.mxu0 0.0
    %1150 = vmatpush1.msra.mxu0 0.0
    %1151 = vmatprep.subr.mxu0 0.0
    %1152 = vmatpush1.msra.mxu0 0.0
    %1153 = vmatprep.subr.mxu0 0.0
    %1154 = vmatpush1.msra.mxu0 0.0
    %1155 = vmatprep.subr.mxu0 0.0
    %1156 = vmatpush1.msra.mxu0 0.0
    %1157 = vmatprep.subr.mxu0 0.0
    %1158 = vmatpush1.msra.mxu0 0.0
    %1159 = vmatprep.subr.mxu0 0.0
    %1160 = vmatpush1.msra.mxu0 0.0
    %1161 = vmatprep.subr.mxu0 0.0
    %1162 = vmatpush1.msra.mxu0 0.0
    %1163 = vmatprep.subr.mxu0 0.0
    %1164 = vmatpush1.msra.mxu0 0.0
    %1165 = vmatprep.subr.mxu0 0.0
    %1166 = vmatpush1.msra.mxu0 0.0
    %1167 = vmatprep.subr.mxu0 0.0
    %1168 = vmatpush1.msra.mxu0 0.0
    %1169 = vmatprep.subr.mxu0 0.0
    %1170 = vmatpush1.msra.mxu0 0.0
    %1171 = vmatprep.subr.mxu0 0.0
    %1172 = vmatpush1.msra.mxu0 0.0
    %1173 = vmatprep.subr.mxu0 0.0
    %1174 = vmatpush1.msra.mxu0 0.0
    %1175 = vmatprep.subr.mxu0 0.0
    %1176 = vmatpush1.msra.mxu0 0.0
    %1177 = vmatprep.subr.mxu0 0.0
    %1178 = vmatpush1.msra.mxu0 0.0
    %1179 = vmatprep.subr.mxu0 0.0
    %1180 = vmatpush1.msra.mxu0 0.0
    %1181 = vmatprep.subr.mxu0 0.0
    %1182 = vmatpush1.msra.mxu0 0.0
    %1183 = vmatprep.subr.mxu0 0.0
    %1184 = vmatpush1.msra.mxu0 0.0
    %1185 = vmatprep.subr.mxu0 0.0
    %1186 = vmatpush1.msra.mxu0 0.0
    %1187 = vmatprep.subr.mxu0 0.0
    %1188 = vmatpush1.msra.mxu0 0.0
    %1189 = vmatprep.subr.mxu0 0.0
    %1190 = vmatpush1.msra.mxu0 0.0
    %1191 = vmatprep.subr.mxu0 0.0
    %1192 = vmatpush1.msra.mxu0 0.0
    %1193 = vmatprep.subr.mxu0 0.0
    %1194 = vmatpush1.msra.mxu0 0.0
    %1195 = vmatprep.subr.mxu0 0.0
    %1196 = vmatpush1.msra.mxu0 0.0
    %1197 = vmatprep.subr.mxu0 0.0
    %1198 = vmatpush1.msra.mxu0 0.0
    %1199 = vmatprep.subr.mxu0 0.0
    %1200 = vmatpush1.msra.mxu0 0.0
    %1201 = vmatprep.mubr.f32.mxu0 0.0
    %1202 = vmatmul.mubr.f32.gmra.mrb[0].mxu0 %v1135
    %v1203 = vpop.f32.mrb[0].mxu0
    %v1204 = vadd.f32 %v1132, %v1203
    %v1205 = vpop.f32.mrb[0].mxu0
    %1206 = vdwg.mxu0
    %v1207 = vmax.f32 %v1204, 0.0
    %v1208 = vld [vmem:[%s10] sm:$0xff]
    %v1209 = vld [vmem:[%s10 + $0x8] sm:$0xff]
    %v1210 = vld [vmem:[%s10 + $0x10] sm:$0xff]
    %v1211 = vld [vmem:[%s10 + $0x18] sm:$0xff]
    %v1213 = vsel %vm234, %v1207, 0
    %1215 = vmatprep.subr.mxu0 0.0
    %1216 = vmatpush1.msra.mxu0 %v1208
    %1217 = vmatprep.subr.mxu0 0.0
    %1218 = vmatpush1.msra.mxu0 %v1209
    %1219 = vmatprep.subr.mxu0 0.0
    %1220 = vmatpush1.msra.mxu0 %v1210
    %1221 = vmatprep.subr.mxu0 0.0
    %1222 = vmatpush1.msra.mxu0 %v1211
    %1223 = vmatprep.subr.mxu0 0.0
    %1224 = vmatpush1.msra.mxu0 0.0
    %1225 = vmatprep.subr.mxu0 0.0
    %1226 = vmatpush1.msra.mxu0 0.0
    %1227 = vmatprep.subr.mxu0 0.0
    %1228 = vmatpush1.msra.mxu0 0.0
    %1229 = vmatprep.subr.mxu0 0.0
    %1230 = vmatpush1.msra.mxu0 0.0
    %1231 = vmatprep.subr.mxu0 0.0
    %1232 = vmatpush1.msra.mxu0 0.0
    %1233 = vmatprep.subr.mxu0 0.0
    %1234 = vmatpush1.msra.mxu0 0.0
    %1235 = vmatprep.subr.mxu0 0.0
    %1236 = vmatpush1.msra.mxu0 0.0
    %1237 = vmatprep.subr.mxu0 0.0
    %1238 = vmatpush1.msra.mxu0 0.0
    %1239 = vmatprep.subr.mxu0 0.0
    %1240 = vmatpush1.msra.mxu0 0.0
    %1241 = vmatprep.subr.mxu0 0.0
    %1242 = vmatpush1.msra.mxu0 0.0
    %1243 = vmatprep.subr.mxu0 0.0
    %1244 = vmatpush1.msra.mxu0 0.0
    %1245 = vmatprep.subr.mxu0 0.0
    %1246 = vmatpush1.msra.mxu0 0.0
    %1247 = vmatprep.subr.mxu0 0.0
    %1248 = vmatpush1.msra.mxu0 0.0
    %1249 = vmatprep.subr.mxu0 0.0
    %1250 = vmatpush1.msra.mxu0 0.0
    %1251 = vmatprep.subr.mxu0 0.0
    %1252 = vmatpush1.msra.mxu0 0.0
    %1253 = vmatprep.subr.mxu0 0.0
    %1254 = vmatpush1.msra.mxu0 0.0
    %1255 = vmatprep.subr.mxu0 0.0
    %1256 = vmatpush1.msra.mxu0 0.0
    %1257 = vmatprep.subr.mxu0 0.0
    %1258 = vmatpush1.msra.mxu0 0.0
    %1259 = vmatprep.subr.mxu0 0.0
    %1260 = vmatpush1.msra.mxu0 0.0
    %1261 = vmatprep.subr.mxu0 0.0
    %1262 = vmatpush1.msra.mxu0 0.0
    %1263 = vmatprep.subr.mxu0 0.0
    %1264 = vmatpush1.msra.mxu0 0.0
    %1265 = vmatprep.subr.mxu0 0.0
    %1266 = vmatpush1.msra.mxu0 0.0
    %1267 = vmatprep.subr.mxu0 0.0
    %1268 = vmatpush1.msra.mxu0 0.0
    %1269 = vmatprep.subr.mxu0 0.0
    %1270 = vmatpush1.msra.mxu0 0.0
    %1271 = vmatprep.subr.mxu0 0.0
    %1272 = vmatpush1.msra.mxu0 0.0
    %1273 = vmatprep.subr.mxu0 0.0
    %1274 = vmatpush1.msra.mxu0 0.0
    %1275 = vmatprep.subr.mxu0 0.0
    %1276 = vmatpush1.msra.mxu0 0.0
    %1277 = vmatprep.subr.mxu0 0.0
    %1278 = vmatpush1.msra.mxu0 0.0
    %1279 = vmatprep.mubr.f32.mxu0 0.0
    %1280 = vmatmul.mubr.f32.gmra.mrb[0].mxu0 %v1213
    %v1281 = vpop.f32.mrb[0].mxu0
    %v1282 = vadd.f32 0.0, %v1281
    %v1283 = vpop.f32.mrb[0].mxu0
    %1284 = vdwg.mxu0
    %v1285 = vadd.f32 %v1042, %v1282
    %s1286 = scalar_lea.vmem %s6, 2
    %v1287 = vld [vmem:[%s1286] sm:$0x3]
    %v1289 = vsel %vm72, %v1287, 0
    %1291 = vmatprep.subr.mxu0 0.0
    %1292 = vmatpush1.msra.mxu0 %v1032
    %1293 = vmatprep.subr.mxu0 0.0
    %1294 = vmatpush1.msra.mxu0 %v1033
    %1295 = vmatprep.subr.mxu0 0.0
    %1296 = vmatpush1.msra.mxu0 0.0
    %1297 = vmatprep.subr.mxu0 0.0
    %1298 = vmatpush1.msra.mxu0 0.0
    %1299 = vmatprep.subr.mxu0 0.0
    %1300 = vmatpush1.msra.mxu0 0.0
    %1301 = vmatprep.subr.mxu0 0.0
    %1302 = vmatpush1.msra.mxu0 0.0
    %1303 = vmatprep.subr.mxu0 0.0
    %1304 = vmatpush1.msra.mxu0 0.0
    %1305 = vmatprep.subr.mxu0 0.0
    %1306 = vmatpush1.msra.mxu0 0.0
    %1307 = vmatprep.subr.mxu0 0.0
    %1308 = vmatpush1.msra.mxu0 0.0
    %1309 = vmatprep.subr.mxu0 0.0
    %1310 = vmatpush1.msra.mxu0 0.0
    %1311 = vmatprep.subr.mxu0 0.0
    %1312 = vmatpush1.msra.mxu0 0.0
    %1313 = vmatprep.subr.mxu0 0.0
    %1314 = vmatpush1.msra.mxu0 0.0
    %1315 = vmatprep.subr.mxu0 0.0
    %1316 = vmatpush1.msra.mxu0 0.0
    %1317 = vmatprep.subr.mxu0 0.0
    %1318 = vmatpush1.msra.mxu0 0.0
    %1319 = vmatprep.subr.mxu0 0.0
    %1320 = vmatpush1.msra.mxu0 0.0
    %1321 = vmatprep.subr.mxu0 0.0
    %1322 = vmatpush1.msra.mxu0 0.0
    %1323 = vmatprep.subr.mxu0 0.0
    %1324 = vmatpush1.msra.mxu0 0.0
    %1325 = vmatprep.subr.mxu0 0.0
    %1326 = vmatpush1.msra.mxu0 0.0
    %1327 = vmatprep.subr.mxu0 0.0
    %1328 = vmatpush1.msra.mxu0 0.0
    %1329 = vmatprep.subr.mxu0 0.0
    %1330 = vmatpush1.msra.mxu0 0.0
    %1331 = vmatprep.subr.mxu0 0.0
    %1332 = vmatpush1.msra.mxu0 0.0
    %1333 = vmatprep.subr.mxu0 0.0
    %1334 = vmatpush1.msra.mxu0 0.0
    %1335 = vmatprep.subr.mxu0 0.0
    %1336 = vmatpush1.msra.mxu0 0.0
    %1337 = vmatprep.subr.mxu0 0.0
    %1338 = vmatpush1.msra.mxu0 0.0
    %1339 = vmatprep.subr.mxu0 0.0
    %1340 = vmatpush1.msra.mxu0 0.0
    %1341 = vmatprep.subr.mxu0 0.0
    %1342 = vmatpush1.msra.mxu0 0.0
    %1343 = vmatprep.subr.mxu0 0.0
    %1344 = vmatpush1.msra.mxu0 0.0
    %1345 = vmatprep.subr.mxu0 0.0
    %1346 = vmatpush1.msra.mxu0 0.0
    %1347 = vmatprep.subr.mxu0 0.0
    %1348 = vmatpush1.msra.mxu0 0.0
    %1349 = vmatprep.subr.mxu0 0.0
    %1350 = vmatpush1.msra.mxu0 0.0
    %1351 = vmatprep.subr.mxu0 0.0
    %1352 = vmatpush1.msra.mxu0 0.0
    %1353 = vmatprep.subr.mxu0 0.0
    %1354 = vmatpush1.msra.mxu0 0.0
    %1355 = vmatprep.mubr.f32.mxu0 0.0
    %1356 = vmatmul.mubr.f32.gmra.mrb[0].mxu0 %v1289
    %v1357 = vpop.f32.mrb[0].mxu0
    %v1358 = vadd.f32 %v1049, %v1357
    %v1359 = vpop.f32.mrb[0].mxu0
    %1360 = vdwg.mxu0
    %v1361 = vxor.u32 %v1358, 2147483648
    %v1362 = vmul.f32 %v1361, 1.442695
    %v1363 = vpow.pop %v1362
    %v1364 = vadd.f32 %v1363, 1.0
    %v1365 = vrcp.pop %v1364
    %v1366 = vmul.f32 1.0, %v1365
    %v1367 = vmul.f32 %v1287, %v1366
    %v1369 = vsel %vm72, %v1367, 0
    %1371 = vmatprep.subr.mxu0 0.0
    %1372 = vmatpush1.msra.mxu0 %v1034
    %1373 = vmatprep.subr.mxu0 0.0
    %1374 = vmatpush1.msra.mxu0 %v1035
    %1375 = vmatprep.subr.mxu0 0.0
    %1376 = vmatpush1.msra.mxu0 0.0
    %1377 = vmatprep.subr.mxu0 0.0
    %1378 = vmatpush1.msra.mxu0 0.0
    %1379 = vmatprep.subr.mxu0 0.0
    %1380 = vmatpush1.msra.mxu0 0.0
    %1381 = vmatprep.subr.mxu0 0.0
    %1382 = vmatpush1.msra.mxu0 0.0
    %1383 = vmatprep.subr.mxu0 0.0
    %1384 = vmatpush1.msra.mxu0 0.0
    %1385 = vmatprep.subr.mxu0 0.0
    %1386 = vmatpush1.msra.mxu0 0.0
    %1387 = vmatprep.subr.mxu0 0.0
    %1388 = vmatpush1.msra.mxu0 0.0
    %1389 = vmatprep.subr.mxu0 0.0
    %1390 = vmatpush1.msra.mxu0 0.0
    %1391 = vmatprep.subr.mxu0 0.0
    %1392 = vmatpush1.msra.mxu0 0.0
    %1393 = vmatprep.subr.mxu0 0.0
    %1394 = vmatpush1.msra.mxu0 0.0
    %1395 = vmatprep.subr.mxu0 0.0
    %1396 = vmatpush1.msra.mxu0 0.0
    %1397 = vmatprep.subr.mxu0 0.0
    %1398 = vmatpush1.msra.mxu0 0.0
    %1399 = vmatprep.subr.mxu0 0.0
    %1400 = vmatpush1.msra.mxu0 0.0
    %1401 = vmatprep.subr.mxu0 0.0
    %1402 = vmatpush1.msra.mxu0 0.0
    %1403 = vmatprep.subr.mxu0 0.0
    %1404 = vmatpush1.msra.mxu0 0.0
    %1405 = vmatprep.subr.mxu0 0.0
    %1406 = vmatpush1.msra.mxu0 0.0
    %1407 = vmatprep.subr.mxu0 0.0
    %1408 = vmatpush1.msra.mxu0 0.0
    %1409 = vmatprep.subr.mxu0 0.0
    %1410 = vmatpush1.msra.mxu0 0.0
    %1411 = vmatprep.subr.mxu0 0.0
    %1412 = vmatpush1.msra.mxu0 0.0
    %1413 = vmatprep.subr.mxu0 0.0
    %1414 = vmatpush1.msra.mxu0 0.0
    %1415 = vmatprep.subr.mxu0 0.0
    %1416 = vmatpush1.msra.mxu0 0.0
    %1417 = vmatprep.subr.mxu0 0.0
    %1418 = vmatpush1.msra.mxu0 0.0
    %1419 = vmatprep.subr.mxu0 0.0
    %1420 = vmatpush1.msra.mxu0 0.0
    %1421 = vmatprep.subr.mxu0 0.0
    %1422 = vmatpush1.msra.mxu0 0.0
    %1423 = vmatprep.subr.mxu0 0.0
    %1424 = vmatpush1.msra.mxu0 0.0
    %1425 = vmatprep.subr.mxu0 0.0
    %1426 = vmatpush1.msra.mxu0 0.0
    %1427 = vmatprep.subr.mxu0 0.0
    %1428 = vmatpush1.msra.mxu0 0.0
    %1429 = vmatprep.subr.mxu0 0.0
    %1430 = vmatpush1.msra.mxu0 0.0
    %1431 = vmatprep.subr.mxu0 0.0
    %1432 = vmatpush1.msra.mxu0 0.0
    %1433 = vmatprep.subr.mxu0 0.0
    %1434 = vmatpush1.msra.mxu0 0.0
    %1435 = vmatprep.mubr.f32.mxu0 0.0
    %1436 = vmatmul.mubr.f32.gmra.mrb[0].mxu0 %v1369
    %v1437 = vpop.f32.mrb[0].mxu0
    %v1438 = vadd.f32 %v1132, %v1437
    %v1439 = vpop.f32.mrb[0].mxu0
    %1440 = vdwg.mxu0
    %v1441 = vmax.f32 %v1438, 0.0
    %s1442 = scalar_lea.vmem %s10, 32
    %v1443 = vld [vmem:[%s1442] sm:$0xff]
    %v1444 = vld [vmem:[%s1442 + $0x8] sm:$0xff]
    %v1445 = vld [vmem:[%s1442 + $0x10] sm:$0xff]
    %v1446 = vld [vmem:[%s1442 + $0x18] sm:$0xff]
    %v1448 = vsel %vm234, %v1441, 0
    %1450 = vmatprep.subr.mxu0 0.0
    %1451 = vmatpush1.msra.mxu0 %v1443
    %1452 = vmatprep.subr.mxu0 0.0
    %1453 = vmatpush1.msra.mxu0 %v1444
    %1454 = vmatprep.subr.mxu0 0.0
    %1455 = vmatpush1.msra.mxu0 %v1445
    %1456 = vmatprep.subr.mxu0 0.0
    %1457 = vmatpush1.msra.mxu0 %v1446
    %1458 = vmatprep.subr.mxu0 0.0
    %1459 = vmatpush1.msra.mxu0 0.0
    %1460 = vmatprep.subr.mxu0 0.0
    %1461 = vmatpush1.msra.mxu0 0.0
    %1462 = vmatprep.subr.mxu0 0.0
    %1463 = vmatpush1.msra.mxu0 0.0
    %1464 = vmatprep.subr.mxu0 0.0
    %1465 = vmatpush1.msra.mxu0 0.0
    %1466 = vmatprep.subr.mxu0 0.0
    %1467 = vmatpush1.msra.mxu0 0.0
    %1468 = vmatprep.subr.mxu0 0.0
    %1469 = vmatpush1.msra.mxu0 0.0
    %1470 = vmatprep.subr.mxu0 0.0
    %1471 = vmatpush1.msra.mxu0 0.0
    %1472 = vmatprep.subr.mxu0 0.0
    %1473 = vmatpush1.msra.mxu0 0.0
    %1474 = vmatprep.subr.mxu0 0.0
    %1475 = vmatpush1.msra.mxu0 0.0
    %1476 = vmatprep.subr.mxu0 0.0
    %1477 = vmatpush1.msra.mxu0 0.0
    %1478 = vmatprep.subr.mxu0 0.0
    %1479 = vmatpush1.msra.mxu0 0.0
    %1480 = vmatprep.subr.mxu0 0.0
    %1481 = vmatpush1.msra.mxu0 0.0
    %1482 = vmatprep.subr.mxu0 0.0
    %1483 = vmatpush1.msra.mxu0 0.0
    %1484 = vmatprep.subr.mxu0 0.0
    %1485 = vmatpush1.msra.mxu0 0.0
    %1486 = vmatprep.subr.mxu0 0.0
    %1487 = vmatpush1.msra.mxu0 0.0
    %1488 = vmatprep.subr.mxu0 0.0
    %1489 = vmatpush1.msra.mxu0 0.0
    %1490 = vmatprep.subr.mxu0 0.0
    %1491 = vmatpush1.msra.mxu0 0.0
    %1492 = vmatprep.subr.mxu0 0.0
    %1493 = vmatpush1.msra.mxu0 0.0
    %1494 = vmatprep.subr.mxu0 0.0
    %1495 = vmatpush1.msra.mxu0 0.0
    %1496 = vmatprep.subr.mxu0 0.0
    %1497 = vmatpush1.msra.mxu0 0.0
    %1498 = vmatprep.subr.mxu0 0.0
    %1499 = vmatpush1.msra.mxu0 0.0
    %1500 = vmatprep.subr.mxu0 0.0
    %1501 = vmatpush1.msra.mxu0 0.0
    %1502 = vmatprep.subr.mxu0 0.0
    %1503 = vmatpush1.msra.mxu0 0.0
    %1504 = vmatprep.subr.mxu0 0.0
    %1505 = vmatpush1.msra.mxu0 0.0
    %1506 = vmatprep.subr.mxu0 0.0
    %1507 = vmatpush1.msra.mxu0 0.0
    %1508 = vmatprep.subr.mxu0 0.0
    %1509 = vmatpush1.msra.mxu0 0.0
    %1510 = vmatprep.subr.mxu0 0.0
    %1511 = vmatpush1.msra.mxu0 0.0
    %1512 = vmatprep.subr.mxu0 0.0
    %1513 = vmatpush1.msra.mxu0 0.0
    %1514 = vmatprep.mubr.f32.mxu0 0.0
    %1515 = vmatmul.mubr.f32.gmra.mrb[0].mxu0 %v1448
    %v1516 = vpop.f32.mrb[0].mxu0
    %v1517 = vadd.f32 0.0, %v1516
    %v1518 = vpop.f32.mrb[0].mxu0
    %1519 = vdwg.mxu0
    %v1520 = vadd.f32 %v1285, %v1517
    %1522 = vset.pattern.permute.xlu0 3
    %1523 = vperm.xlu0 %1522, %v1520
    %v1524 = vpop.permute.xlu0 %1523
    %v1526 = vmul.f32 %v1524, %v1520
    %1528 = vrot.lane.b32.xlu0 %v1526, 124
    %v1529 = vpop.permute.xlu0 %1528
    %v1531 = vadd.f32 %v1024, %v1529
    %1532 = vrot.lane.b32.xlu0 %v1520, 7
    %v1533 = vpop.permute.xlu0 %1532
    %vm1535 = vcmask 74808
    %1536 = vst.msk [vmem:[#allocation2] sm:$0x3] %vm1535, %v1533
    %vm1537 = vcmask 83024
    %1538 = vst.msk [vmem:[#allocation2] sm:$0x3] %vm1537, %v1533
    %vm1539 = vcmask 17408
    %1540 = vst.msk [vmem:[#allocation2] sm:$0x3] %vm1539, %v1531
    // Predicated region
    $region54: #{tpu_custom_call.1} parent=1 // pred_check
      _
    $region55: #{tpu_custom_call.1} parent=1 // pred_check_branch
      %1542 = sbr.rel (0) target = $region57
    $region56: #{tpu_custom_call.1} parent=1 // pred_region
      %s1544 = ssub.s32 32, 32
      %1545 = vsyncadd [#allocation3], %s1544
      %s1547 = sshll.u32 [#allocation2], 4
      %s1548 = int_to_ptr.vmem [resolvable:$true] %s1547
      %1550 = dma.vmem_to_hbm [thread:$0]  %s1548, 32, %s13, [#allocation3]
    $region57: #{tpu_custom_call.1} parent=1 // pred_fallthru
      _
    // Predicated region
    $region58: #{tpu_custom_call.1} parent=1 // pred_check
      _
    $region59: #{tpu_custom_call.1} parent=1 // pred_check_branch
      %1552 = sbr.rel (0) target = $region61
    $region60: #{tpu_custom_call.1} parent=1 // pred_region
      %1553 = dma.done [#allocation3], 32
    $region61: #{tpu_custom_call.1} parent=1 // pred_fallthru
      _
    %1554 = vsyncpa [#allocation3], 1

</llo_original>
